<compile_context>
chip_gen: v5e
topology: v5e:2x2
jax: 0.10.0
libtpu: 0.0.40
codegen_flags: <defaults>
</compile_context>

<pallas_src>
import jax
import jax.numpy as jnp
from jax import lax
from jax.experimental import pallas as pl
from jax.experimental.pallas import tpu as pltpu

EPS = 1e-5
_SQRT1_2 = 0.7071067811865476


def _gelu_exact(v):
    # PyTorch nn.GELU() default: exact erf-based GELU (f32).
    return 0.5 * v * (1.0 + lax.erf(v * _SQRT1_2))


def _gelu_tanh(v):
    # Opt-in tanh approximation (EUP path); differs slightly from nn.GELU().
    c = 0.7978845608028654  # sqrt(2/pi)
    return 0.5 * v * (1.0 + jnp.tanh(c * (v + 0.044715 * v * v * v)))


def _make_mixer_kernel(approx_gelu):
    gelu = _gelu_tanh if approx_gelu else _gelu_exact

    def kernel(x_ref, seg_ref, g1_ref, b1_ref, g2_ref, b2_ref,
               wt1_ref, bt1_ref, wt2_ref, bt2_ref,
               wc1_ref, bc1_ref, wc2_ref, bc2_ref, out_ref):
        f32 = jnp.float32
        x = x_ref[...].astype(f32)          # (T, L)   L = bb*H
        seg = seg_ref[...]                  # (L, L)   per-batch segment-mean matrix (f32)
        mm = wt1_ref.dtype                  # matmul operand dtype for the MLP matmuls

        def cast(v):
            return v if v.dtype == mm else v.astype(mm)

        def layernorm(v, gamma, beta):
            # mean / biased-variance per (token, batch-segment) via MXU:
            # (v @ seg) broadcasts each segment's mean across its H lanes.
            mu = jnp.dot(v, seg, preferred_element_type=f32)
            c = v - mu
            var = jnp.dot(c * c, seg, preferred_element_type=f32)
            return c * lax.rsqrt(var + EPS) * gamma + beta

        # LayerNorm1 over hidden dim.
        yn = layernorm(x, g1_ref[...], b1_ref[...])                        # (T, L)

        # Token-mixing MLP; causal masked token-sum is pre-folded into wt1.
        h1 = jnp.dot(wt1_ref[...], cast(yn),
                     preferred_element_type=f32) + bt1_ref[...]            # (Mt, L)
        h1 = gelu(h1)
        h2 = jnp.dot(wt2_ref[...], cast(h1),
                     preferred_element_type=f32) + bt2_ref[...]            # (T, L)

        # LayerNorm2 over hidden dim.
        y2 = layernorm(h2, g2_ref[...], b2_ref[...])                       # (T, L)

        # Channel-mixing MLP via per-batch block-diagonal weights.
        c1 = jnp.dot(cast(y2), wc1_ref[...],
                     preferred_element_type=f32) + bc1_ref[...]            # (T, Lc)
        c1 = gelu(c1)
        out = jnp.dot(cast(c1), wc2_ref[...],
                      preferred_element_type=f32) + bc2_ref[...]           # (T, L)

        out_ref[...] = out.astype(out_ref.dtype)

    return kernel


def _tpu_topology():
    """(vmem_capacity_bytes, tensorcores_per_chip) with safe fallbacks."""
    vmem_cap = 128 << 20
    try:
        info = pltpu.get_tpu_info()
        vmem_cap = int(getattr(info, "vmem_capacity_bytes", vmem_cap))
    except Exception:
        pass
    # v7x: 64 MiB VMEM per TC, 2 TCs/chip.  v5e/v6e: 128 MiB, 1 TC.
    num_tc = 2 if vmem_cap <= (64 << 20) else 1
    return vmem_cap, num_tc


def _pick_bb(B, T, H, Mt, Mc, itemsize, vmem_cap, num_tc):
    """Per-step batch block.  bb == B (one grid step) on 1-TC chips; >= 2
    grid steps on 2-TC chips.  Blocks must be lane-legal and fit VMEM."""
    budget = max(vmem_cap // 2, 8 << 20)

    def lane_ok(d):
        return d == B or (d * H) % 128 == 0

    def fits(d):
        L, Lc = d * H, d * Mc
        act = 2 * 2 * T * L * itemsize                         # x + out, double-buffered
        wts = 2 * 4 * (L * L + 2 * L * Lc + Mt * L + 6 * T * L
                       + T * Lc + 2 * Mt * T)
        return act + wts + (1 << 20) <= budget

    divs = [d for d in range(1, B + 1) if B % d == 0 and lane_ok(d)]
    good = [d for d in divs if fits(d)] or divs
    if num_tc >= 2 and B >= 2:
        multi = [d for d in good if d <= B // 2]
        if multi:
            return max(multi)
    return max(good)


def autoregressive_mixer_block(x, params, *, matmul_dtype=jnp.float32,
                               approx_gelu=False):
    B, T, H = x.shape
    Mt = params["wt1"].shape[0]
    Mc = params["wc1"].shape[0]
    f32 = jnp.float32
    out_dtype = x.dtype
    itemsize = jnp.dtype(x.dtype).itemsize

    vmem_cap, num_tc = _tpu_topology()
    bb = _pick_bb(B, T, H, Mt, Mc, itemsize, vmem_cap, num_tc)
    steps = B // bb
    L, Lc = bb * H, bb * Mc

    # Lane-dense activation layout: tokens on sublanes, batch*hidden on lanes.
    xT = jnp.transpose(x, (1, 0, 2)).reshape(T, B * H)          # (T, B*H)

    # ---- host-side parameter prep (all tiny) ----
    # Fold the causal masked token-sum into wt1: wt1m[m,i] = sum_{j<=i} wt1[m,j].
    wt1m = (params["wt1"].astype(f32)
            @ jnp.triu(jnp.ones((T, T), f32))).astype(matmul_dtype)        # (Mt, T)
    wt2 = params["wt2"].astype(matmul_dtype)                               # (T, Mt)

    eye_bb = jnp.eye(bb, dtype=f32)
    seg = jnp.kron(eye_bb, jnp.full((H, H), 1.0 / H, dtype=f32))           # (L, L)
    wc1_bd = jnp.kron(eye_bb, params["wc1"].T.astype(f32)).astype(matmul_dtype)  # (L, Lc)
    wc2_bd = jnp.kron(eye_bb, params["wc2"].T.astype(f32)).astype(matmul_dtype)  # (Lc, L)

    def lane_tile(v, rows):
        # (n,) -> (rows, bb*n): tiled along lanes per batch segment,
        # pre-broadcast along sublanes (no per-step broadcast_in_dim).
        return jnp.broadcast_to(jnp.tile(v.astype(f32), bb)[None, :],
                                (rows, bb * v.shape[0]))

    g1 = lane_tile(params["g1"], T)
    b1 = lane_tile(params["b1"], T)
    g2 = lane_tile(params["g2"], T)
    b2 = lane_tile(params["b2"], T)
    bc1 = lane_tile(params["bc1"], T)                                      # (T, Lc)
    bc2 = lane_tile(params["bc2"], T)                                      # (T, L)
    bt1 = jnp.broadcast_to(params["bt1"].astype(f32)[:, None], (Mt, L))    # (Mt, L)
    bt2 = jnp.broadcast_to(params["bt2"].astype(f32)[:, None], (T, L))     # (T, L)

    args = (xT, seg, g1, b1, g2, b2, wt1m, bt1, wt2, bt2,
            wc1_bd, bc1, wc2_bd, bc2)

    def full_spec(a):
        return pl.BlockSpec(a.shape, lambda i, nd=a.ndim: (0,) * nd)

    in_specs = [pl.BlockSpec((T, L), lambda i: (0, i))]
    in_specs += [full_spec(a) for a in args[1:]]
    out_specs = pl.BlockSpec((T, L), lambda i: (0, i))

    # VMEM scoped limit from the actual block footprint (+headroom), capped
    # per generation (v7x: 64 MiB per TC; v5e/v6e: 128 MiB).
    act_bytes = 2 * (T * L * itemsize + T * L * jnp.dtype(out_dtype).itemsize)
    wt_bytes = 2 * sum(int(a.size) * a.dtype.itemsize for a in args[1:])
    vmem_limit = int(min(max(2 * (act_bytes + wt_bytes) + (4 << 20), 16 << 20),
                         (vmem_cap * 3) // 4))

    per_step_flops = 2 * T * L * (4 * L + 2 * Mt + 2 * Lc)
    cost = pl.CostEstimate(
        flops=steps * per_step_flops,
        transcendentals=steps * (Mt * L + T * Lc),
        bytes_accessed=int(sum(int(a.size) * a.dtype.itemsize for a in args)
                           + T * B * H * jnp.dtype(out_dtype).itemsize))

    outT = pl.pallas_call(
        _make_mixer_kernel(approx_gelu),
        out_shape=jax.ShapeDtypeStruct((T, B * H), out_dtype),
        grid=(steps,),
        in_specs=in_specs,
        out_specs=out_specs,
        compiler_params=pltpu.CompilerParams(
            dimension_semantics=("parallel",),
            vmem_limit_bytes=vmem_limit),
        cost_estimate=cost,
    )(*args)

    # (T, B*H) -> (B, T, H): wrapper-side layout plumbing (tiny).
    return jnp.transpose(outT.reshape(T, B, H), (1, 0, 2))


def reference(x, p):
    # Pure-JAX mirror of the PyTorch forward (f32, for verification).
    def ln(v, g, b):
        mu = v.mean(-1, keepdims=True)
        var = ((v - mu) ** 2).mean(-1, keepdims=True)
        return (v - mu) / jnp.sqrt(var + EPS) * g + b

    def gelu(v):
        return 0.5 * v * (1.0 + lax.erf(v / jnp.sqrt(2.0)))

    B, T, H = x.shape
    y = ln(x, p["g1"], p["b1"])                          # (B, T, H)
    y = jnp.transpose(y, (0, 2, 1))                      # (B, H, T)
    mask = jnp.tril(jnp.ones((T, T), jnp.float32))
    y = (y[..., None] * mask[None, None]).sum(axis=2)    # (B, H, T)
    y = gelu(y @ p["wt1"].T + p["bt1"]) @ p["wt2"].T + p["bt2"]
    y = jnp.transpose(y, (0, 2, 1))                      # (B, T, H)
    y = ln(y, p["g2"], p["b2"])
    return gelu(y @ p["wc1"].T + p["bc1"]) @ p["wc2"].T + p["bc2"]


if __name__ == "__main__":
    B, T, H = 8, 8, 32          # batch, num_tokens, hidden_dim
    Mt, Mc = 16, 64             # tokens_mlp_dim, channels_mlp_dim

    key = jax.random.PRNGKey(0)
    ks = jax.random.split(key, 10)

    params = {
        "g1": jnp.ones((H,), jnp.float32),
        "b1": jnp.zeros((H,), jnp.float32),
        "g2": jnp.ones((H,), jnp.float32),
        "b2": jnp.zeros((H,), jnp.float32),
        "wt1": 0.1 * jax.random.normal(ks[0], (Mt, T), jnp.float32),
        "bt1": 0.1 * jax.random.normal(ks[1], (Mt,), jnp.float32),
        "wt2": 0.1 * jax.random.normal(ks[2], (T, Mt), jnp.float32),
        "bt2": 0.1 * jax.random.normal(ks[3], (T,), jnp.float32),
        "wc1": 0.1 * jax.random.normal(ks[4], (Mc, H), jnp.float32),
        "bc1": 0.1 * jax.random.normal(ks[5], (Mc,), jnp.float32),
        "wc2": 0.1 * jax.random.normal(ks[6], (H, Mc), jnp.float32),
        "bc2": 0.1 * jax.random.normal(ks[7], (H,), jnp.float32),
    }

    x = jax.random.normal(ks[8], (B, T, H), jnp.float32)

    ref = jax.block_until_ready(reference(x, params))

    out = jax.block_until_ready(autoregressive_mixer_block(x, params))
    assert out.shape == (B, T, H)
    assert jnp.allclose(out, ref, atol=1e-4, rtol=1e-4), "mismatch vs reference"

    print("KERNEL_OK")
</pallas_src>

<mosaic_0001>
module attributes {stable_mosaic.version = 11 : i64} {
  func.func @kernel(%arg0: i32, %arg1: memref<8x256xf32, #tpu.memory_space<vmem>>, %arg2: memref<256x256xf32, #tpu.memory_space<vmem>>, %arg3: memref<8x256xf32, #tpu.memory_space<vmem>>, %arg4: memref<8x256xf32, #tpu.memory_space<vmem>>, %arg5: memref<8x256xf32, #tpu.memory_space<vmem>>, %arg6: memref<8x256xf32, #tpu.memory_space<vmem>>, %arg7: memref<16x8xf32, #tpu.memory_space<vmem>>, %arg8: memref<16x256xf32, #tpu.memory_space<vmem>>, %arg9: memref<8x16xf32, #tpu.memory_space<vmem>>, %arg10: memref<8x256xf32, #tpu.memory_space<vmem>>, %arg11: memref<256x512xf32, #tpu.memory_space<vmem>>, %arg12: memref<8x512xf32, #tpu.memory_space<vmem>>, %arg13: memref<512x256xf32, #tpu.memory_space<vmem>>, %arg14: memref<8x256xf32, #tpu.memory_space<vmem>>, %arg15: memref<8x256xf32, #tpu.memory_space<vmem>>) attributes {dimension_semantics = [#tpu.dimension_semantics<parallel>], iteration_bounds = array<i64: 1>, scalar_prefetch = 0 : i64, scratch_operands = 0 : i64, tpu.core_type = #tpu.core_type<tc>, window_params = [{transform_indices = @transform_0, window_bounds = array<i64: 8, 256>}, {pipeline_mode = #tpu.pipeline_mode<synchronous>, transform_indices = @transform_1, window_bounds = array<i64: 256, 256>}, {pipeline_mode = #tpu.pipeline_mode<synchronous>, transform_indices = @transform_2, window_bounds = array<i64: 8, 256>}, {pipeline_mode = #tpu.pipeline_mode<synchronous>, transform_indices = @transform_3, window_bounds = array<i64: 8, 256>}, {pipeline_mode = #tpu.pipeline_mode<synchronous>, transform_indices = @transform_4, window_bounds = array<i64: 8, 256>}, {pipeline_mode = #tpu.pipeline_mode<synchronous>, transform_indices = @transform_5, window_bounds = array<i64: 8, 256>}, {pipeline_mode = #tpu.pipeline_mode<synchronous>, transform_indices = @transform_6, window_bounds = array<i64: 16, 8>}, {pipeline_mode = #tpu.pipeline_mode<synchronous>, transform_indices = @transform_7, window_bounds = array<i64: 16, 256>}, {pipeline_mode = #tpu.pipeline_mode<synchronous>, transform_indices = @transform_8, window_bounds = array<i64: 8, 16>}, {pipeline_mode = #tpu.pipeline_mode<synchronous>, transform_indices = @transform_9, window_bounds = array<i64: 8, 256>}, {pipeline_mode = #tpu.pipeline_mode<synchronous>, transform_indices = @transform_10, window_bounds = array<i64: 256, 512>}, {pipeline_mode = #tpu.pipeline_mode<synchronous>, transform_indices = @transform_11, window_bounds = array<i64: 8, 512>}, {pipeline_mode = #tpu.pipeline_mode<synchronous>, transform_indices = @transform_12, window_bounds = array<i64: 512, 256>}, {pipeline_mode = #tpu.pipeline_mode<synchronous>, transform_indices = @transform_13, window_bounds = array<i64: 8, 256>}, {transform_indices = @transform_14, window_bounds = array<i64: 8, 256>}]} {
    %c0 = arith.constant 0 : index
    %c0_0 = arith.constant 0 : index
    %0 = vector.load %arg1[%c0, %c0_0] : memref<8x256xf32, #tpu.memory_space<vmem>>, vector<8x256xf32>
    %c0_1 = arith.constant 0 : index
    %c0_2 = arith.constant 0 : index
    %1 = vector.load %arg2[%c0_1, %c0_2] : memref<256x256xf32, #tpu.memory_space<vmem>>, vector<256x256xf32>
    %c0_3 = arith.constant 0 : index
    %c0_4 = arith.constant 0 : index
    %2 = vector.load %arg3[%c0_3, %c0_4] : memref<8x256xf32, #tpu.memory_space<vmem>>, vector<8x256xf32>
    %c0_5 = arith.constant 0 : index
    %c0_6 = arith.constant 0 : index
    %3 = vector.load %arg4[%c0_5, %c0_6] : memref<8x256xf32, #tpu.memory_space<vmem>>, vector<8x256xf32>
    %cst = arith.constant dense<0.000000e+00> : vector<8x256xf32>
    %4 = tpu.matmul %0, %1, %cst {dimension_numbers = #tpu.dot_dimension_numbers<[1], [0], [0], [1], [0, 0, 1, 1], [], []>} : vector<8x256xf32>, vector<256x256xf32>, vector<8x256xf32> -> vector<8x256xf32>
    %5 = arith.subf %0, %4 : vector<8x256xf32>
    %6 = arith.mulf %5, %5 : vector<8x256xf32>
    %cst_7 = arith.constant dense<0.000000e+00> : vector<8x256xf32>
    %7 = tpu.matmul %6, %1, %cst_7 {dimension_numbers = #tpu.dot_dimension_numbers<[1], [0], [0], [1], [0, 0, 1, 1], [], []>} : vector<8x256xf32>, vector<256x256xf32>, vector<8x256xf32> -> vector<8x256xf32>
    %cst_8 = arith.constant 9.99999974E-6 : f32
    %8 = vector.broadcast %cst_8 : f32 to vector<8x256xf32>
    %9 = arith.addf %7, %8 : vector<8x256xf32>
    %10 = math.rsqrt %9 : vector<8x256xf32>
    %11 = arith.mulf %5, %10 : vector<8x256xf32>
    %12 = arith.mulf %11, %2 : vector<8x256xf32>
    %13 = arith.addf %12, %3 : vector<8x256xf32>
    %c0_9 = arith.constant 0 : index
    %c0_10 = arith.constant 0 : index
    %14 = vector.load %arg7[%c0_9, %c0_10] : memref<16x8xf32, #tpu.memory_space<vmem>>, vector<16x8xf32>
    %cst_11 = arith.constant dense<0.000000e+00> : vector<16x256xf32>
    %15 = tpu.matmul %14, %13, %cst_11 {dimension_numbers = #tpu.dot_dimension_numbers<[1], [0], [0], [1], [0, 0, 1, 1], [], []>} : vector<16x8xf32>, vector<8x256xf32>, vector<16x256xf32> -> vector<16x256xf32>
    %c0_12 = arith.constant 0 : index
    %c0_13 = arith.constant 0 : index
    %16 = vector.load %arg8[%c0_12, %c0_13] : memref<16x256xf32, #tpu.memory_space<vmem>>, vector<16x256xf32>
    %17 = arith.addf %15, %16 : vector<16x256xf32>
    %cst_14 = arith.constant 5.000000e-01 : f32
    %18 = vector.broadcast %cst_14 : f32 to vector<16x256xf32>
    %19 = arith.mulf %18, %17 : vector<16x256xf32>
    %cst_15 = arith.constant 0.707106769 : f32
    %20 = vector.broadcast %cst_15 : f32 to vector<16x256xf32>
    %21 = arith.mulf %17, %20 : vector<16x256xf32>
    %22 = math.erf %21 : vector<16x256xf32>
    %cst_16 = arith.constant 1.000000e+00 : f32
    %23 = vector.broadcast %cst_16 : f32 to vector<16x256xf32>
    %24 = arith.addf %23, %22 : vector<16x256xf32>
    %25 = arith.mulf %19, %24 : vector<16x256xf32>
    %c0_17 = arith.constant 0 : index
    %c0_18 = arith.constant 0 : index
    %26 = vector.load %arg9[%c0_17, %c0_18] : memref<8x16xf32, #tpu.memory_space<vmem>>, vector<8x16xf32>
    %cst_19 = arith.constant dense<0.000000e+00> : vector<8x256xf32>
    %27 = tpu.matmul %26, %25, %cst_19 {dimension_numbers = #tpu.dot_dimension_numbers<[1], [0], [0], [1], [0, 0, 1, 1], [], []>} : vector<8x16xf32>, vector<16x256xf32>, vector<8x256xf32> -> vector<8x256xf32>
    %c0_20 = arith.constant 0 : index
    %c0_21 = arith.constant 0 : index
    %28 = vector.load %arg10[%c0_20, %c0_21] : memref<8x256xf32, #tpu.memory_space<vmem>>, vector<8x256xf32>
    %29 = arith.addf %27, %28 : vector<8x256xf32>
    %c0_22 = arith.constant 0 : index
    %c0_23 = arith.constant 0 : index
    %30 = vector.load %arg5[%c0_22, %c0_23] : memref<8x256xf32, #tpu.memory_space<vmem>>, vector<8x256xf32>
    %c0_24 = arith.constant 0 : index
    %c0_25 = arith.constant 0 : index
    %31 = vector.load %arg6[%c0_24, %c0_25] : memref<8x256xf32, #tpu.memory_space<vmem>>, vector<8x256xf32>
    %cst_26 = arith.constant dense<0.000000e+00> : vector<8x256xf32>
    %32 = tpu.matmul %29, %1, %cst_26 {dimension_numbers = #tpu.dot_dimension_numbers<[1], [0], [0], [1], [0, 0, 1, 1], [], []>} : vector<8x256xf32>, vector<256x256xf32>, vector<8x256xf32> -> vector<8x256xf32>
    %33 = arith.subf %29, %32 : vector<8x256xf32>
    %34 = arith.mulf %33, %33 : vector<8x256xf32>
    %cst_27 = arith.constant dense<0.000000e+00> : vector<8x256xf32>
    %35 = tpu.matmul %34, %1, %cst_27 {dimension_numbers = #tpu.dot_dimension_numbers<[1], [0], [0], [1], [0, 0, 1, 1], [], []>} : vector<8x256xf32>, vector<256x256xf32>, vector<8x256xf32> -> vector<8x256xf32>
    %cst_28 = arith.constant 9.99999974E-6 : f32
    %36 = vector.broadcast %cst_28 : f32 to vector<8x256xf32>
    %37 = arith.addf %35, %36 : vector<8x256xf32>
    %38 = math.rsqrt %37 : vector<8x256xf32>
    %39 = arith.mulf %33, %38 : vector<8x256xf32>
    %40 = arith.mulf %39, %30 : vector<8x256xf32>
    %41 = arith.addf %40, %31 : vector<8x256xf32>
    %c0_29 = arith.constant 0 : index
    %c0_30 = arith.constant 0 : index
    %42 = vector.load %arg11[%c0_29, %c0_30] : memref<256x512xf32, #tpu.memory_space<vmem>>, vector<256x512xf32>
    %cst_31 = arith.constant dense<0.000000e+00> : vector<8x512xf32>
    %43 = tpu.matmul %41, %42, %cst_31 {dimension_numbers = #tpu.dot_dimension_numbers<[1], [0], [0], [1], [0, 0, 1, 1], [], []>} : vector<8x256xf32>, vector<256x512xf32>, vector<8x512xf32> -> vector<8x512xf32>
    %c0_32 = arith.constant 0 : index
    %c0_33 = arith.constant 0 : index
    %44 = vector.load %arg12[%c0_32, %c0_33] : memref<8x512xf32, #tpu.memory_space<vmem>>, vector<8x512xf32>
    %45 = arith.addf %43, %44 : vector<8x512xf32>
    %cst_34 = arith.constant 5.000000e-01 : f32
    %46 = vector.broadcast %cst_34 : f32 to vector<8x512xf32>
    %47 = arith.mulf %46, %45 : vector<8x512xf32>
    %cst_35 = arith.constant 0.707106769 : f32
    %48 = vector.broadcast %cst_35 : f32 to vector<8x512xf32>
    %49 = arith.mulf %45, %48 : vector<8x512xf32>
    %50 = math.erf %49 : vector<8x512xf32>
    %cst_36 = arith.constant 1.000000e+00 : f32
    %51 = vector.broadcast %cst_36 : f32 to vector<8x512xf32>
    %52 = arith.addf %51, %50 : vector<8x512xf32>
    %53 = arith.mulf %47, %52 : vector<8x512xf32>
    %c0_37 = arith.constant 0 : index
    %c0_38 = arith.constant 0 : index
    %54 = vector.load %arg13[%c0_37, %c0_38] : memref<512x256xf32, #tpu.memory_space<vmem>>, vector<512x256xf32>
    %cst_39 = arith.constant dense<0.000000e+00> : vector<8x256xf32>
    %55 = tpu.matmul %53, %54, %cst_39 {dimension_numbers = #tpu.dot_dimension_numbers<[1], [0], [0], [1], [0, 0, 1, 1], [], []>} : vector<8x512xf32>, vector<512x256xf32>, vector<8x256xf32> -> vector<8x256xf32>
    %c0_40 = arith.constant 0 : index
    %c0_41 = arith.constant 0 : index
    %56 = vector.load %arg14[%c0_40, %c0_41] : memref<8x256xf32, #tpu.memory_space<vmem>>, vector<8x256xf32>
    %57 = arith.addf %55, %56 : vector<8x256xf32>
    %c0_42 = arith.constant 0 : index
    %c0_43 = arith.constant 0 : index
    %58 = vector.load %arg15[%c0_42, %c0_43] : memref<8x256xf32, #tpu.memory_space<vmem>>, vector<8x256xf32>
    tpu.vector_store %arg15[%c0_42, %c0_43], %57 {strides = array<i32>} : memref<8x256xf32, #tpu.memory_space<vmem>>, vector<8x256xf32>,
    return
  }
  func.func @transform_0(%arg0: i32) -> (i32, i32) {
    %c0_i32 = arith.constant 0 : i32
    %c0_i32_0 = arith.constant 0 : i32
    return %c0_i32, %arg0 : i32, i32
  }
  func.func @transform_1(%arg0: i32) -> (i32, i32) {
    %c0_i32 = arith.constant 0 : i32
    %c0_i32_0 = arith.constant 0 : i32
    %c0_i32_1 = arith.constant 0 : i32
    return %c0_i32, %c0_i32_0 : i32, i32
  }
  func.func @transform_2(%arg0: i32) -> (i32, i32) {
    %c0_i32 = arith.constant 0 : i32
    %c0_i32_0 = arith.constant 0 : i32
    %c0_i32_1 = arith.constant 0 : i32
    return %c0_i32, %c0_i32_0 : i32, i32
  }
  func.func @transform_3(%arg0: i32) -> (i32, i32) {
    %c0_i32 = arith.constant 0 : i32
    %c0_i32_0 = arith.constant 0 : i32
    %c0_i32_1 = arith.constant 0 : i32
    return %c0_i32, %c0_i32_0 : i32, i32
  }
  func.func @transform_4(%arg0: i32) -> (i32, i32) {
    %c0_i32 = arith.constant 0 : i32
    %c0_i32_0 = arith.constant 0 : i32
    %c0_i32_1 = arith.constant 0 : i32
    return %c0_i32, %c0_i32_0 : i32, i32
  }
  func.func @transform_5(%arg0: i32) -> (i32, i32) {
    %c0_i32 = arith.constant 0 : i32
    %c0_i32_0 = arith.constant 0 : i32
    %c0_i32_1 = arith.constant 0 : i32
    return %c0_i32, %c0_i32_0 : i32, i32
  }
  func.func @transform_6(%arg0: i32) -> (i32, i32) {
    %c0_i32 = arith.constant 0 : i32
    %c0_i32_0 = arith.constant 0 : i32
    %c0_i32_1 = arith.constant 0 : i32
    return %c0_i32, %c0_i32_0 : i32, i32
  }
  func.func @transform_7(%arg0: i32) -> (i32, i32) {
    %c0_i32 = arith.constant 0 : i32
    %c0_i32_0 = arith.constant 0 : i32
    %c0_i32_1 = arith.constant 0 : i32
    return %c0_i32, %c0_i32_0 : i32, i32
  }
  func.func @transform_8(%arg0: i32) -> (i32, i32) {
    %c0_i32 = arith.constant 0 : i32
    %c0_i32_0 = arith.constant 0 : i32
    %c0_i32_1 = arith.constant 0 : i32
    return %c0_i32, %c0_i32_0 : i32, i32
  }
  func.func @transform_9(%arg0: i32) -> (i32, i32) {
    %c0_i32 = arith.constant 0 : i32
    %c0_i32_0 = arith.constant 0 : i32
    %c0_i32_1 = arith.constant 0 : i32
    return %c0_i32, %c0_i32_0 : i32, i32
  }
  func.func @transform_10(%arg0: i32) -> (i32, i32) {
    %c0_i32 = arith.constant 0 : i32
    %c0_i32_0 = arith.constant 0 : i32
    %c0_i32_1 = arith.constant 0 : i32
    return %c0_i32, %c0_i32_0 : i32, i32
  }
  func.func @transform_11(%arg0: i32) -> (i32, i32) {
    %c0_i32 = arith.constant 0 : i32
    %c0_i32_0 = arith.constant 0 : i32
    %c0_i32_1 = arith.constant 0 : i32
    return %c0_i32, %c0_i32_0 : i32, i32
  }
  func.func @transform_12(%arg0: i32) -> (i32, i32) {
    %c0_i32 = arith.constant 0 : i32
    %c0_i32_0 = arith.constant 0 : i32
    %c0_i32_1 = arith.constant 0 : i32
    return %c0_i32, %c0_i32_0 : i32, i32
  }
  func.func @transform_13(%arg0: i32) -> (i32, i32) {
    %c0_i32 = arith.constant 0 : i32
    %c0_i32_0 = arith.constant 0 : i32
    %c0_i32_1 = arith.constant 0 : i32
    return %c0_i32, %c0_i32_0 : i32, i32
  }
  func.func @transform_14(%arg0: i32) -> (i32, i32) {
    %c0_i32 = arith.constant 0 : i32
    %c0_i32_0 = arith.constant 0 : i32
    return %c0_i32, %arg0 : i32, i32
  }
}

</mosaic_0001>

<llo_original>
// kernel: tpu_custom_call.1
$region0: #{tpu_custom_call.1}
  #allocation0 [shape = 'u32[]', space=smem, size = 0x4, offset = 0x4, fixed_abs, tag = 'smem constant byte address 0x4 - core index']
  #allocation1 [shape = 'u32[72,128]{1,0:T(1,128)}', space=vmem, size = 0x9000, scoped, tag = 'internal scratch']
  %s0 = inlined_call_operand.hbm [shape: f32[8,256], index: 0, kind: input, shape index: {}]
  %s1 = inlined_call_operand.hbm [shape: f32[256,256], index: 1, kind: input, shape index: {}]
  %s2 = inlined_call_operand.hbm [shape: f32[8,256], index: 2, kind: input, shape index: {}]
  %s3 = inlined_call_operand.hbm [shape: f32[8,256], index: 3, kind: input, shape index: {}]
  %s4 = inlined_call_operand.hbm [shape: f32[8,256], index: 4, kind: input, shape index: {}]
  %s5 = inlined_call_operand.hbm [shape: f32[8,256], index: 5, kind: input, shape index: {}]
  %s6 = inlined_call_operand.vmem [shape: f32[16,8], index: 6, kind: input, shape index: {}]
  %s7 = inlined_call_operand.hbm [shape: f32[16,256], index: 7, kind: input, shape index: {}]
  %s8 = inlined_call_operand.hbm [shape: f32[8,16], index: 8, kind: input, shape index: {}]
  %s9 = inlined_call_operand.hbm [shape: f32[8,256], index: 9, kind: input, shape index: {}]
  %s10 = inlined_call_operand.hbm [shape: f32[256,512], index: 10, kind: input, shape index: {}]
  %s11 = inlined_call_operand.vmem [shape: f32[8,512], index: 11, kind: input, shape index: {}]
  %s12 = inlined_call_operand.hbm [shape: f32[512,256], index: 12, kind: input, shape index: {}]
  %s13 = inlined_call_operand.hbm [shape: f32[8,256], index: 13, kind: input, shape index: {}]
  %s14 = inlined_call_operand.hbm [shape: f32[8,256], index: 14, kind: output, shape index: {}]
  %s15 = sld [smem:[#allocation0]]
  $region114: #{tpu_custom_call.1} parent=0
    _
  %s17 = ssub.s32 1, %s15
  %s18 = scalar_select 0, %s17, %s15
  $region1: #{tpu_custom_call.1} parent=0
    #allocation2 [shape = 'u8[8192]{0}', space=vmem, size = 0x2000, scoped, tag = 'input window, operand 0, single buffered']
    #allocation3 [shape = 's32[1]{0}', space=sflag, size = 0x4, scoped, tag = 'scoped memory for tpu_custom_call.1']
    #allocation4 [shape = 's32[1]{0}', space=sflag, size = 0x4, scoped, tag = 'scoped memory for tpu_custom_call.1']
    #allocation5 [shape = 'u8[262144]{0}', space=vmem, size = 0x40000, scoped, tag = 'input window, operand 1, single buffered']
    #allocation6 [shape = 's32[1]{0}', space=sflag, size = 0x4, scoped, tag = 'scoped memory for tpu_custom_call.1']
    #allocation7 [shape = 'u8[8192]{0}', space=vmem, size = 0x2000, scoped, tag = 'input window, operand 2, single buffered']
    #allocation8 [shape = 'u8[8192]{0}', space=vmem, size = 0x2000, scoped, tag = 'input window, operand 3, single buffered']
    #allocation9 [shape = 's32[1]{0}', space=sflag, size = 0x4, scoped, tag = 'scoped memory for tpu_custom_call.1']
    #allocation10 [shape = 'u8[8192]{0}', space=vmem, size = 0x2000, scoped, tag = 'input window, operand 4, single buffered']
    #allocation11 [shape = 'u8[8192]{0}', space=vmem, size = 0x2000, scoped, tag = 'input window, operand 5, single buffered']
    #allocation12 [shape = 's32[1]{0}', space=sflag, size = 0x4, scoped, tag = 'scoped memory for tpu_custom_call.1']
    #allocation13 [shape = 'u8[16384]{0}', space=vmem, size = 0x4000, scoped, tag = 'input window, operand 7, single buffered']
    #allocation14 [shape = 'u8[4096]{0}', space=vmem, size = 0x1000, scoped, tag = 'input window, operand 8, single buffered']
    #allocation15 [shape = 's32[1]{0}', space=sflag, size = 0x4, scoped, tag = 'scoped memory for tpu_custom_call.1']
    #allocation16 [shape = 'u8[8192]{0}', space=vmem, size = 0x2000, scoped, tag = 'input window, operand 9, single buffered']
    #allocation17 [shape = 'u8[524288]{0}', space=vmem, size = 0x80000, scoped, tag = 'input window, operand 10, single buffered']
    #allocation18 [shape = 's32[1]{0}', space=sflag, size = 0x4, scoped, tag = 'scoped memory for tpu_custom_call.1']
    #allocation19 [shape = 'u8[524288]{0}', space=vmem, size = 0x80000, scoped, tag = 'input window, operand 12, single buffered']
    #allocation20 [shape = 'u8[8192]{0}', space=vmem, size = 0x2000, scoped, tag = 'input window, operand 13, single buffered']
    #allocation21 [shape = 's32[1]{0}', space=sflag, size = 0x4, scoped, tag = 'scoped memory for tpu_custom_call.1']
    #allocation22 [shape = 'u8[8192]{0}', space=vmem, size = 0x2000, scoped, tag = 'output window, operand 0, single buffered']
    %19 = vsyncpa [#allocation3], 0
    %20 = vsyncpa [#allocation6], 0
    %21 = vsyncpa [#allocation9], 0
    %22 = vsyncpa [#allocation12], 0
    %23 = vsyncpa [#allocation15], 0
    %24 = vsyncpa [#allocation18], 0
    %25 = vsyncpa [#allocation21], 0
    %26 = vsyncpa [#allocation4], 0
    // Predicated region
    $region2: #{tpu_custom_call.1} parent=1 // pred_check
      _
    $region3: #{tpu_custom_call.1} parent=1 // pred_check_branch
      %28 = sbr.rel (0) target = $region5
    $region4: #{tpu_custom_call.1} parent=1 // pred_region
      %30 = vsyncadd [#allocation3], 0
      %s32 = sshll.u32 %s0, 4
      %s33 = int_to_ptr.hbm [resolvable:$true] %s32
      %s34 = sshll.u32 [#allocation2], 4
      %s35 = int_to_ptr.vmem [resolvable:$true] %s34
      %37 = dma.hbm_to_vmem [thread:$0]  %s33, 256, %s35, [#allocation3]
    $region5: #{tpu_custom_call.1} parent=1 // pred_fallthru
      _
    // Predicated region
    $region6: #{tpu_custom_call.1} parent=1 // pred_check
      _
    $region7: #{tpu_custom_call.1} parent=1 // pred_check_branch
      %39 = sbr.rel (0) target = $region9
    $region8: #{tpu_custom_call.1} parent=1 // pred_region
      %41 = vsyncadd [#allocation6], 0
      %s42 = sshll.u32 %s1, 4
      %s43 = int_to_ptr.hbm [resolvable:$true] %s42
      %s44 = sshll.u32 [#allocation5], 4
      %s45 = int_to_ptr.vmem [resolvable:$true] %s44
      %50 = dma.hbm_to_vmem [thread:$0]  %s43, 8192, %s45, [#allocation6], 256, 256, 16
    $region9: #{tpu_custom_call.1} parent=1 // pred_fallthru
      _
    // Predicated region
    $region10: #{tpu_custom_call.1} parent=1 // pred_check
      _
    $region11: #{tpu_custom_call.1} parent=1 // pred_check_branch
      %52 = sbr.rel (0) target = $region13
    $region12: #{tpu_custom_call.1} parent=1 // pred_region
      %54 = vsyncadd [#allocation6], 0
      %s56 = sshll.u32 %s2, 4
      %s57 = int_to_ptr.hbm [resolvable:$true] %s56
      %s58 = sshll.u32 [#allocation7], 4
      %s59 = int_to_ptr.vmem [resolvable:$true] %s58
      %61 = dma.hbm_to_vmem [thread:$0]  %s57, 256, %s59, [#allocation6]
    $region13: #{tpu_custom_call.1} parent=1 // pred_fallthru
      _
    // Predicated region
    $region14: #{tpu_custom_call.1} parent=1 // pred_check
      _
    $region15: #{tpu_custom_call.1} parent=1 // pred_check_branch
      %63 = sbr.rel (0) target = $region17
    $region16: #{tpu_custom_call.1} parent=1 // pred_region
      %65 = vsyncadd [#allocation9], 0
      %s67 = sshll.u32 %s3, 4
      %s68 = int_to_ptr.hbm [resolvable:$true] %s67
      %s69 = sshll.u32 [#allocation8], 4
      %s70 = int_to_ptr.vmem [resolvable:$true] %s69
      %72 = dma.hbm_to_vmem [thread:$0]  %s68, 256, %s70, [#allocation9]
    $region17: #{tpu_custom_call.1} parent=1 // pred_fallthru
      _
    // Predicated region
    $region18: #{tpu_custom_call.1} parent=1 // pred_check
      _
    $region19: #{tpu_custom_call.1} parent=1 // pred_check_branch
      %74 = sbr.rel (0) target = $region21
    $region20: #{tpu_custom_call.1} parent=1 // pred_region
      %76 = vsyncadd [#allocation9], 0
      %s78 = sshll.u32 %s4, 4
      %s79 = int_to_ptr.hbm [resolvable:$true] %s78
      %s80 = sshll.u32 [#allocation10], 4
      %s81 = int_to_ptr.vmem [resolvable:$true] %s80
      %83 = dma.hbm_to_vmem [thread:$0]  %s79, 256, %s81, [#allocation9]
    $region21: #{tpu_custom_call.1} parent=1 // pred_fallthru
      _
    // Predicated region
    $region22: #{tpu_custom_call.1} parent=1 // pred_check
      _
    $region23: #{tpu_custom_call.1} parent=1 // pred_check_branch
      %85 = sbr.rel (0) target = $region25
    $region24: #{tpu_custom_call.1} parent=1 // pred_region
      %87 = vsyncadd [#allocation12], 0
      %s89 = sshll.u32 %s5, 4
      %s90 = int_to_ptr.hbm [resolvable:$true] %s89
      %s91 = sshll.u32 [#allocation11], 4
      %s92 = int_to_ptr.vmem [resolvable:$true] %s91
      %94 = dma.hbm_to_vmem [thread:$0]  %s90, 256, %s92, [#allocation12]
    $region25: #{tpu_custom_call.1} parent=1 // pred_fallthru
      _
    // Predicated region
    $region26: #{tpu_custom_call.1} parent=1 // pred_check
      _
    $region27: #{tpu_custom_call.1} parent=1 // pred_check_branch
      %96 = sbr.rel (0) target = $region29
    $region28: #{tpu_custom_call.1} parent=1 // pred_region
      _
    $region29: #{tpu_custom_call.1} parent=1 // pred_fallthru
      _
    // Predicated region
    $region30: #{tpu_custom_call.1} parent=1 // pred_check
      _
    $region31: #{tpu_custom_call.1} parent=1 // pred_check_branch
      %98 = sbr.rel (0) target = $region33
    $region32: #{tpu_custom_call.1} parent=1 // pred_region
      %100 = vsyncadd [#allocation12], 0
      %s101 = sshll.u32 %s7, 4
      %s102 = int_to_ptr.hbm [resolvable:$true] %s101
      %s103 = sshll.u32 [#allocation13], 4
      %s104 = int_to_ptr.vmem [resolvable:$true] %s103
      %109 = dma.hbm_to_vmem [thread:$0]  %s102, 512, %s104, [#allocation12], 256, 256, 16
    $region33: #{tpu_custom_call.1} parent=1 // pred_fallthru
      _
    // Predicated region
    $region34: #{tpu_custom_call.1} parent=1 // pred_check
      _
    $region35: #{tpu_custom_call.1} parent=1 // pred_check_branch
      %111 = sbr.rel (0) target = $region37
    $region36: #{tpu_custom_call.1} parent=1 // pred_region
      %113 = vsyncadd [#allocation15], 0
      %s115 = sshll.u32 %s8, 4
      %s116 = int_to_ptr.hbm [resolvable:$true] %s115
      %s117 = sshll.u32 [#allocation14], 4
      %s118 = int_to_ptr.vmem [resolvable:$true] %s117
      %120 = dma.hbm_to_vmem [thread:$0]  %s116, 128, %s118, [#allocation15]
    $region37: #{tpu_custom_call.1} parent=1 // pred_fallthru
      _
    // Predicated region
    $region38: #{tpu_custom_call.1} parent=1 // pred_check
      _
    $region39: #{tpu_custom_call.1} parent=1 // pred_check_branch
      %122 = sbr.rel (0) target = $region41
    $region40: #{tpu_custom_call.1} parent=1 // pred_region
      %124 = vsyncadd [#allocation15], 0
      %s126 = sshll.u32 %s9, 4
      %s127 = int_to_ptr.hbm [resolvable:$true] %s126
      %s128 = sshll.u32 [#allocation16], 4
      %s129 = int_to_ptr.vmem [resolvable:$true] %s128
      %131 = dma.hbm_to_vmem [thread:$0]  %s127, 256, %s129, [#allocation15]
    $region41: #{tpu_custom_call.1} parent=1 // pred_fallthru
      _
    // Predicated region
    $region42: #{tpu_custom_call.1} parent=1 // pred_check
      _
    $region43: #{tpu_custom_call.1} parent=1 // pred_check_branch
      %133 = sbr.rel (0) target = $region45
    $region44: #{tpu_custom_call.1} parent=1 // pred_region
      %135 = vsyncadd [#allocation18], 0
      %s136 = sshll.u32 %s10, 4
      %s137 = int_to_ptr.hbm [resolvable:$true] %s136
      %s138 = sshll.u32 [#allocation17], 4
      %s139 = int_to_ptr.vmem [resolvable:$true] %s138
      %144 = dma.hbm_to_vmem [thread:$0]  %s137, 16384, %s139, [#allocation18], 512, 512, 32
    $region45: #{tpu_custom_call.1} parent=1 // pred_fallthru
      _
    // Predicated region
    $region46: #{tpu_custom_call.1} parent=1 // pred_check
      _
    $region47: #{tpu_custom_call.1} parent=1 // pred_check_branch
      %146 = sbr.rel (0) target = $region49
    $region48: #{tpu_custom_call.1} parent=1 // pred_region
      _
    $region49: #{tpu_custom_call.1} parent=1 // pred_fallthru
      _
    // Predicated region
    $region50: #{tpu_custom_call.1} parent=1 // pred_check
      _
    $region51: #{tpu_custom_call.1} parent=1 // pred_check_branch
      %148 = sbr.rel (0) target = $region53
    $region52: #{tpu_custom_call.1} parent=1 // pred_region
      %150 = vsyncadd [#allocation18], 0
      %s151 = sshll.u32 %s12, 4
      %s152 = int_to_ptr.hbm [resolvable:$true] %s151
      %s153 = sshll.u32 [#allocation19], 4
      %s154 = int_to_ptr.vmem [resolvable:$true] %s153
      %159 = dma.hbm_to_vmem [thread:$0]  %s152, 16384, %s154, [#allocation18], 256, 256, 16
    $region53: #{tpu_custom_call.1} parent=1 // pred_fallthru
      _
    // Predicated region
    $region54: #{tpu_custom_call.1} parent=1 // pred_check
      _
    $region55: #{tpu_custom_call.1} parent=1 // pred_check_branch
      %161 = sbr.rel (0) target = $region57
    $region56: #{tpu_custom_call.1} parent=1 // pred_region
      %163 = vsyncadd [#allocation21], 0
      %s165 = sshll.u32 %s13, 4
      %s166 = int_to_ptr.hbm [resolvable:$true] %s165
      %s167 = sshll.u32 [#allocation20], 4
      %s168 = int_to_ptr.vmem [resolvable:$true] %s167
      %170 = dma.hbm_to_vmem [thread:$0]  %s166, 256, %s168, [#allocation21]
    $region57: #{tpu_custom_call.1} parent=1 // pred_fallthru
      _
    // Predicated region
    $region58: #{tpu_custom_call.1} parent=1 // pred_check
      _
    $region59: #{tpu_custom_call.1} parent=1 // pred_check_branch
      %172 = sbr.rel (0) target = $region61
    $region60: #{tpu_custom_call.1} parent=1 // pred_region
      %174 = dma.done [#allocation3], 256
    $region61: #{tpu_custom_call.1} parent=1 // pred_fallthru
      _
    // Predicated region
    $region62: #{tpu_custom_call.1} parent=1 // pred_check
      _
    $region63: #{tpu_custom_call.1} parent=1 // pred_check_branch
      %176 = sbr.rel (0) target = $region65
    $region64: #{tpu_custom_call.1} parent=1 // pred_region
      %178 = dma.done [#allocation6], 8192
    $region65: #{tpu_custom_call.1} parent=1 // pred_fallthru
      _
    // Predicated region
    $region66: #{tpu_custom_call.1} parent=1 // pred_check
      _
    $region67: #{tpu_custom_call.1} parent=1 // pred_check_branch
      %180 = sbr.rel (0) target = $region69
    $region68: #{tpu_custom_call.1} parent=1 // pred_region
      %182 = dma.done [#allocation6], 256
    $region69: #{tpu_custom_call.1} parent=1 // pred_fallthru
      _
    // Predicated region
    $region70: #{tpu_custom_call.1} parent=1 // pred_check
      _
    $region71: #{tpu_custom_call.1} parent=1 // pred_check_branch
      %184 = sbr.rel (0) target = $region73
    $region72: #{tpu_custom_call.1} parent=1 // pred_region
      %186 = dma.done [#allocation9], 256
    $region73: #{tpu_custom_call.1} parent=1 // pred_fallthru
      _
    // Predicated region
    $region74: #{tpu_custom_call.1} parent=1 // pred_check
      _
    $region75: #{tpu_custom_call.1} parent=1 // pred_check_branch
      %188 = sbr.rel (0) target = $region77
    $region76: #{tpu_custom_call.1} parent=1 // pred_region
      %190 = dma.done [#allocation9], 256
    $region77: #{tpu_custom_call.1} parent=1 // pred_fallthru
      _
    // Predicated region
    $region78: #{tpu_custom_call.1} parent=1 // pred_check
      _
    $region79: #{tpu_custom_call.1} parent=1 // pred_check_branch
      %192 = sbr.rel (0) target = $region81
    $region80: #{tpu_custom_call.1} parent=1 // pred_region
      %194 = dma.done [#allocation12], 256
    $region81: #{tpu_custom_call.1} parent=1 // pred_fallthru
      _
    // Predicated region
    $region82: #{tpu_custom_call.1} parent=1 // pred_check
      _
    $region83: #{tpu_custom_call.1} parent=1 // pred_check_branch
      %196 = sbr.rel (0) target = $region85
    $region84: #{tpu_custom_call.1} parent=1 // pred_region
      %198 = dma.done [#allocation12], 512
    $region85: #{tpu_custom_call.1} parent=1 // pred_fallthru
      _
    // Predicated region
    $region86: #{tpu_custom_call.1} parent=1 // pred_check
      _
    $region87: #{tpu_custom_call.1} parent=1 // pred_check_branch
      %200 = sbr.rel (0) target = $region89
    $region88: #{tpu_custom_call.1} parent=1 // pred_region
      %202 = dma.done [#allocation15], 128
    $region89: #{tpu_custom_call.1} parent=1 // pred_fallthru
      _
    // Predicated region
    $region90: #{tpu_custom_call.1} parent=1 // pred_check
      _
    $region91: #{tpu_custom_call.1} parent=1 // pred_check_branch
      %204 = sbr.rel (0) target = $region93
    $region92: #{tpu_custom_call.1} parent=1 // pred_region
      %206 = dma.done [#allocation15], 256
    $region93: #{tpu_custom_call.1} parent=1 // pred_fallthru
      _
    // Predicated region
    $region94: #{tpu_custom_call.1} parent=1 // pred_check
      _
    $region95: #{tpu_custom_call.1} parent=1 // pred_check_branch
      %208 = sbr.rel (0) target = $region97
    $region96: #{tpu_custom_call.1} parent=1 // pred_region
      %210 = dma.done [#allocation18], 16384
    $region97: #{tpu_custom_call.1} parent=1 // pred_fallthru
      _
    // Predicated region
    $region98: #{tpu_custom_call.1} parent=1 // pred_check
      _
    $region99: #{tpu_custom_call.1} parent=1 // pred_check_branch
      %212 = sbr.rel (0) target = $region101
    $region100: #{tpu_custom_call.1} parent=1 // pred_region
      %214 = dma.done [#allocation18], 16384
    $region101: #{tpu_custom_call.1} parent=1 // pred_fallthru
      _
    // Predicated region
    $region102: #{tpu_custom_call.1} parent=1 // pred_check
      _
    $region103: #{tpu_custom_call.1} parent=1 // pred_check_branch
      %216 = sbr.rel (0) target = $region105
    $region104: #{tpu_custom_call.1} parent=1 // pred_region
      %218 = dma.done [#allocation21], 256
    $region105: #{tpu_custom_call.1} parent=1 // pred_fallthru
      _
    %v219 = vld [vmem:[#allocation2] sm:$0xff]
    %v220 = vld [vmem:[#allocation2 + $0x8] sm:$0xff]
    %v221 = vld [vmem:[#allocation5] sm:$0xff]
    %v222 = vld [vmem:[#allocation5 + $0x8] sm:$0xff]
    %v223 = vld [vmem:[#allocation5 + $0x10] sm:$0xff]
    %v224 = vld [vmem:[#allocation5 + $0x18] sm:$0xff]
    %v225 = vld [vmem:[#allocation5 + $0x20] sm:$0xff]
    %v226 = vld [vmem:[#allocation5 + $0x28] sm:$0xff]
    %v227 = vld [vmem:[#allocation5 + $0x30] sm:$0xff]
    %v228 = vld [vmem:[#allocation5 + $0x38] sm:$0xff]
    %v229 = vld [vmem:[#allocation5 + $0x40] sm:$0xff]
    %v230 = vld [vmem:[#allocation5 + $0x48] sm:$0xff]
    %v231 = vld [vmem:[#allocation5 + $0x50] sm:$0xff]
    %v232 = vld [vmem:[#allocation5 + $0x58] sm:$0xff]
    %v233 = vld [vmem:[#allocation5 + $0x60] sm:$0xff]
    %v234 = vld [vmem:[#allocation5 + $0x68] sm:$0xff]
    %v235 = vld [vmem:[#allocation5 + $0x70] sm:$0xff]
    %v236 = vld [vmem:[#allocation5 + $0x78] sm:$0xff]
    %v237 = vld [vmem:[#allocation5 + $0x80] sm:$0xff]
    %v238 = vld [vmem:[#allocation5 + $0x88] sm:$0xff]
    %v239 = vld [vmem:[#allocation5 + $0x90] sm:$0xff]
    %v240 = vld [vmem:[#allocation5 + $0x98] sm:$0xff]
    %v241 = vld [vmem:[#allocation5 + $0xa0] sm:$0xff]
    %v242 = vld [vmem:[#allocation5 + $0xa8] sm:$0xff]
    %v243 = vld [vmem:[#allocation5 + $0xb0] sm:$0xff]
    %v244 = vld [vmem:[#allocation5 + $0xb8] sm:$0xff]
    %v245 = vld [vmem:[#allocation5 + $0xc0] sm:$0xff]
    %v246 = vld [vmem:[#allocation5 + $0xc8] sm:$0xff]
    %v247 = vld [vmem:[#allocation5 + $0xd0] sm:$0xff]
    %v248 = vld [vmem:[#allocation5 + $0xd8] sm:$0xff]
    %v249 = vld [vmem:[#allocation5 + $0xe0] sm:$0xff]
    %v250 = vld [vmem:[#allocation5 + $0xe8] sm:$0xff]
    %v251 = vld [vmem:[#allocation5 + $0xf0] sm:$0xff]
    %v252 = vld [vmem:[#allocation5 + $0xf8] sm:$0xff]
    %v253 = vld [vmem:[#allocation5 + $0x100] sm:$0xff]
    %v254 = vld [vmem:[#allocation5 + $0x108] sm:$0xff]
    %v255 = vld [vmem:[#allocation5 + $0x110] sm:$0xff]
    %v256 = vld [vmem:[#allocation5 + $0x118] sm:$0xff]
    %v257 = vld [vmem:[#allocation5 + $0x120] sm:$0xff]
    %v258 = vld [vmem:[#allocation5 + $0x128] sm:$0xff]
    %v259 = vld [vmem:[#allocation5 + $0x130] sm:$0xff]
    %v260 = vld [vmem:[#allocation5 + $0x138] sm:$0xff]
    %v261 = vld [vmem:[#allocation5 + $0x140] sm:$0xff]
    %v262 = vld [vmem:[#allocation5 + $0x148] sm:$0xff]
    %v263 = vld [vmem:[#allocation5 + $0x150] sm:$0xff]
    %v264 = vld [vmem:[#allocation5 + $0x158] sm:$0xff]
    %v265 = vld [vmem:[#allocation5 + $0x160] sm:$0xff]
    %v266 = vld [vmem:[#allocation5 + $0x168] sm:$0xff]
    %v267 = vld [vmem:[#allocation5 + $0x170] sm:$0xff]
    %v268 = vld [vmem:[#allocation5 + $0x178] sm:$0xff]
    %v269 = vld [vmem:[#allocation5 + $0x180] sm:$0xff]
    %v270 = vld [vmem:[#allocation5 + $0x188] sm:$0xff]
    %v271 = vld [vmem:[#allocation5 + $0x190] sm:$0xff]
    %v272 = vld [vmem:[#allocation5 + $0x198] sm:$0xff]
    %v273 = vld [vmem:[#allocation5 + $0x1a0] sm:$0xff]
    %v274 = vld [vmem:[#allocation5 + $0x1a8] sm:$0xff]
    %v275 = vld [vmem:[#allocation5 + $0x1b0] sm:$0xff]
    %v276 = vld [vmem:[#allocation5 + $0x1b8] sm:$0xff]
    %v277 = vld [vmem:[#allocation5 + $0x1c0] sm:$0xff]
    %v278 = vld [vmem:[#allocation5 + $0x1c8] sm:$0xff]
    %v279 = vld [vmem:[#allocation5 + $0x1d0] sm:$0xff]
    %v280 = vld [vmem:[#allocation5 + $0x1d8] sm:$0xff]
    %v281 = vld [vmem:[#allocation5 + $0x1e0] sm:$0xff]
    %v282 = vld [vmem:[#allocation5 + $0x1e8] sm:$0xff]
    %v283 = vld [vmem:[#allocation5 + $0x1f0] sm:$0xff]
    %v284 = vld [vmem:[#allocation5 + $0x1f8] sm:$0xff]
    %v285 = vld [vmem:[#allocation7] sm:$0xff]
    %v286 = vld [vmem:[#allocation7 + $0x8] sm:$0xff]
    %v287 = vld [vmem:[#allocation8] sm:$0xff]
    %v288 = vld [vmem:[#allocation8 + $0x8] sm:$0xff]
    %289 = vmatpush.msra.mxu0 %v251
    %290 = vmatpush.msra.mxu0 %v249
    %291 = vmatpush.msra.mxu0 %v247
    %292 = vmatpush.msra.mxu0 %v245
    %293 = vmatpush.msra.mxu0 %v243
    %294 = vmatpush.msra.mxu0 %v241
    %295 = vmatpush.msra.mxu0 %v239
    %296 = vmatpush.msra.mxu0 %v237
    %297 = vmatpush.msra.mxu0 %v235
    %298 = vmatpush.msra.mxu0 %v233
    %299 = vmatpush.msra.mxu0 %v231
    %300 = vmatpush.msra.mxu0 %v229
    %301 = vmatpush.msra.mxu0 %v227
    %302 = vmatpush.msra.mxu0 %v225
    %303 = vmatpush.msra.mxu0 %v223
    %304 = vmatpush.msra.mxu0 %v221
    %305 = vmatmul.f32.gmra.mxu0 %v219
    %v306 = vpop.f32.mrf.mxu0
    %v307 = vadd.f32 0.0, %v306
    %308 = vdwg.mxu0
    %309 = vmatpush.msra.mxu0 %v283
    %310 = vmatpush.msra.mxu0 %v281
    %311 = vmatpush.msra.mxu0 %v279
    %312 = vmatpush.msra.mxu0 %v277
    %313 = vmatpush.msra.mxu0 %v275
    %314 = vmatpush.msra.mxu0 %v273
    %315 = vmatpush.msra.mxu0 %v271
    %316 = vmatpush.msra.mxu0 %v269
    %317 = vmatpush.msra.mxu0 %v267
    %318 = vmatpush.msra.mxu0 %v265
    %319 = vmatpush.msra.mxu0 %v263
    %320 = vmatpush.msra.mxu0 %v261
    %321 = vmatpush.msra.mxu0 %v259
    %322 = vmatpush.msra.mxu0 %v257
    %323 = vmatpush.msra.mxu0 %v255
    %324 = vmatpush.msra.mxu0 %v253
    %325 = vmatmul.f32.gmra.mxu0 %v220
    %v326 = vpop.f32.mrf.mxu0
    %v327 = vadd.f32 %v307, %v326
    %328 = vdwg.mxu0
    %329 = vmatpush.msra.mxu0 %v252
    %330 = vmatpush.msra.mxu0 %v250
    %331 = vmatpush.msra.mxu0 %v248
    %332 = vmatpush.msra.mxu0 %v246
    %333 = vmatpush.msra.mxu0 %v244
    %334 = vmatpush.msra.mxu0 %v242
    %335 = vmatpush.msra.mxu0 %v240
    %336 = vmatpush.msra.mxu0 %v238
    %337 = vmatpush.msra.mxu0 %v236
    %338 = vmatpush.msra.mxu0 %v234
    %339 = vmatpush.msra.mxu0 %v232
    %340 = vmatpush.msra.mxu0 %v230
    %341 = vmatpush.msra.mxu0 %v228
    %342 = vmatpush.msra.mxu0 %v226
    %343 = vmatpush.msra.mxu0 %v224
    %344 = vmatpush.msra.mxu0 %v222
    %345 = vmatmul.f32.gmra.mxu0 %v219
    %v346 = vpop.f32.mrf.mxu0
    %v347 = vadd.f32 0.0, %v346
    %348 = vdwg.mxu0
    %349 = vmatpush.msra.mxu0 %v284
    %350 = vmatpush.msra.mxu0 %v282
    %351 = vmatpush.msra.mxu0 %v280
    %352 = vmatpush.msra.mxu0 %v278
    %353 = vmatpush.msra.mxu0 %v276
    %354 = vmatpush.msra.mxu0 %v274
    %355 = vmatpush.msra.mxu0 %v272
    %356 = vmatpush.msra.mxu0 %v270
    %357 = vmatpush.msra.mxu0 %v268
    %358 = vmatpush.msra.mxu0 %v266
    %359 = vmatpush.msra.mxu0 %v264
    %360 = vmatpush.msra.mxu0 %v262
    %361 = vmatpush.msra.mxu0 %v260
    %362 = vmatpush.msra.mxu0 %v258
    %363 = vmatpush.msra.mxu0 %v256
    %364 = vmatpush.msra.mxu0 %v254
    %365 = vmatmul.f32.gmra.mxu0 %v220
    %v366 = vpop.f32.mrf.mxu0
    %v367 = vadd.f32 %v347, %v366
    %368 = vdwg.mxu0
    %v369 = vsub.f32 %v219, %v327
    %v370 = vsub.f32 %v220, %v367
    %v371 = vmul.f32 %v369, %v369
    %v372 = vmul.f32 %v370, %v370
    %373 = vmatpush.msra.mxu0 %v251
    %374 = vmatpush.msra.mxu0 %v249
    %375 = vmatpush.msra.mxu0 %v247
    %376 = vmatpush.msra.mxu0 %v245
    %377 = vmatpush.msra.mxu0 %v243
    %378 = vmatpush.msra.mxu0 %v241
    %379 = vmatpush.msra.mxu0 %v239
    %380 = vmatpush.msra.mxu0 %v237
    %381 = vmatpush.msra.mxu0 %v235
    %382 = vmatpush.msra.mxu0 %v233
    %383 = vmatpush.msra.mxu0 %v231
    %384 = vmatpush.msra.mxu0 %v229
    %385 = vmatpush.msra.mxu0 %v227
    %386 = vmatpush.msra.mxu0 %v225
    %387 = vmatpush.msra.mxu0 %v223
    %388 = vmatpush.msra.mxu0 %v221
    %389 = vmatmul.f32.gmra.mxu0 %v371
    %v390 = vpop.f32.mrf.mxu0
    %v391 = vadd.f32 1e-05, %v390
    %392 = vdwg.mxu0
    %393 = vmatpush.msra.mxu0 %v283
    %394 = vmatpush.msra.mxu0 %v281
    %395 = vmatpush.msra.mxu0 %v279
    %396 = vmatpush.msra.mxu0 %v277
    %397 = vmatpush.msra.mxu0 %v275
    %398 = vmatpush.msra.mxu0 %v273
    %399 = vmatpush.msra.mxu0 %v271
    %400 = vmatpush.msra.mxu0 %v269
    %401 = vmatpush.msra.mxu0 %v267
    %402 = vmatpush.msra.mxu0 %v265
    %403 = vmatpush.msra.mxu0 %v263
    %404 = vmatpush.msra.mxu0 %v261
    %405 = vmatpush.msra.mxu0 %v259
    %406 = vmatpush.msra.mxu0 %v257
    %407 = vmatpush.msra.mxu0 %v255
    %408 = vmatpush.msra.mxu0 %v253
    %409 = vmatmul.f32.gmra.mxu0 %v372
    %v410 = vpop.f32.mrf.mxu0
    %v411 = vadd.f32 %v391, %v410
    %412 = vdwg.mxu0
    %413 = vmatpush.msra.mxu0 %v252
    %414 = vmatpush.msra.mxu0 %v250
    %415 = vmatpush.msra.mxu0 %v248
    %416 = vmatpush.msra.mxu0 %v246
    %417 = vmatpush.msra.mxu0 %v244
    %418 = vmatpush.msra.mxu0 %v242
    %419 = vmatpush.msra.mxu0 %v240
    %420 = vmatpush.msra.mxu0 %v238
    %421 = vmatpush.msra.mxu0 %v236
    %422 = vmatpush.msra.mxu0 %v234
    %423 = vmatpush.msra.mxu0 %v232
    %424 = vmatpush.msra.mxu0 %v230
    %425 = vmatpush.msra.mxu0 %v228
    %426 = vmatpush.msra.mxu0 %v226
    %427 = vmatpush.msra.mxu0 %v224
    %428 = vmatpush.msra.mxu0 %v222
    %429 = vmatmul.f32.gmra.mxu0 %v371
    %v430 = vpop.f32.mrf.mxu0
    %v431 = vadd.f32 1e-05, %v430
    %432 = vdwg.mxu0
    %433 = vmatpush.msra.mxu0 %v284
    %434 = vmatpush.msra.mxu0 %v282
    %435 = vmatpush.msra.mxu0 %v280
    %436 = vmatpush.msra.mxu0 %v278
    %437 = vmatpush.msra.mxu0 %v276
    %438 = vmatpush.msra.mxu0 %v274
    %439 = vmatpush.msra.mxu0 %v272
    %440 = vmatpush.msra.mxu0 %v270
    %441 = vmatpush.msra.mxu0 %v268
    %442 = vmatpush.msra.mxu0 %v266
    %443 = vmatpush.msra.mxu0 %v264
    %444 = vmatpush.msra.mxu0 %v262
    %445 = vmatpush.msra.mxu0 %v260
    %446 = vmatpush.msra.mxu0 %v258
    %447 = vmatpush.msra.mxu0 %v256
    %448 = vmatpush.msra.mxu0 %v254
    %449 = vmatmul.f32.gmra.mxu0 %v372
    %v450 = vpop.f32.mrf.mxu0
    %v451 = vadd.f32 %v431, %v450
    %452 = vdwg.mxu0
    %v453 = vrsqrt.pop %v411
    %v454 = vmul.f32 %v453, %v411
    %v455 = vmul.f32 %v454, %v453
    %v456 = vmul.f32 0.5, %v455
    %v457 = vsub.f32 1.5, %v456
    %v458 = vmul.f32 %v453, %v457
    %vm459 = vweird.f32 %v411
    %vm460 = vweird.f32 %v453
    %vm461 = vmor %vm459, %vm460
    %v462 = vsel %vm461, %v453, %v458
    %v463 = vrsqrt.pop %v451
    %v464 = vmul.f32 %v463, %v451
    %v465 = vmul.f32 %v464, %v463
    %v466 = vmul.f32 0.5, %v465
    %v467 = vsub.f32 1.5, %v466
    %v468 = vmul.f32 %v463, %v467
    %vm469 = vweird.f32 %v451
    %vm470 = vweird.f32 %v463
    %vm471 = vmor %vm469, %vm470
    %v472 = vsel %vm471, %v463, %v468
    %v473 = vmul.f32 %v369, %v462
    %v474 = vmul.f32 %v370, %v472
    %v475 = vmul.f32 %v473, %v285
    %v476 = vmul.f32 %v474, %v286
    %v477 = vadd.f32 %v475, %v287
    %v478 = vadd.f32 %v476, %v288
    %v479 = vld [vmem:[%s6] sm:$0xff]
    %v480 = vld [vmem:[%s6 + $0x8] sm:$0xff]
    %v481 = vld [vmem:[#allocation13] sm:$0xff]
    %v482 = vld [vmem:[#allocation13 + $0x8] sm:$0xff]
    %v483 = vld [vmem:[#allocation13 + $0x10] sm:$0xff]
    %v484 = vld [vmem:[#allocation13 + $0x18] sm:$0xff]
    %vm485 = vcmask 64512
    %v487 = vsel %vm485, %v479, 0
    %v490 = vsel %vm485, %v480, 0
    %492 = vmatpush.msra.mxu0 0.0
    %493 = vmatpush.msra.mxu0 0.0
    %494 = vmatpush.msra.mxu0 0.0
    %495 = vmatpush.msra.mxu0 0.0
    %496 = vmatpush.msra.mxu0 0.0
    %497 = vmatpush.msra.mxu0 0.0
    %498 = vmatpush.msra.mxu0 0.0
    %499 = vmatpush.msra.mxu0 0.0
    %500 = vmatpush.msra.mxu0 0.0
    %501 = vmatpush.msra.mxu0 0.0
    %502 = vmatpush.msra.mxu0 0.0
    %503 = vmatpush.msra.mxu0 0.0
    %504 = vmatpush.msra.mxu0 0.0
    %505 = vmatpush.msra.mxu0 0.0
    %506 = vmatpush.msra.mxu0 0.0
    %507 = vmatpush.msra.mxu0 %v477
    %508 = vmatmul.f32.gmra.mxu0 %v487
    %v509 = vpop.f32.mrf.mxu0
    %v510 = vadd.f32 %v481, %v509
    %511 = vmatmul.f32.gmra.mxu0 %v490
    %v512 = vpop.f32.mrf.mxu0
    %v513 = vadd.f32 %v483, %v512
    %514 = vdwg.mxu0
    %515 = vmatpush.msra.mxu0 0.0
    %516 = vmatpush.msra.mxu0 0.0
    %517 = vmatpush.msra.mxu0 0.0
    %518 = vmatpush.msra.mxu0 0.0
    %519 = vmatpush.msra.mxu0 0.0
    %520 = vmatpush.msra.mxu0 0.0
    %521 = vmatpush.msra.mxu0 0.0
    %522 = vmatpush.msra.mxu0 0.0
    %523 = vmatpush.msra.mxu0 0.0
    %524 = vmatpush.msra.mxu0 0.0
    %525 = vmatpush.msra.mxu0 0.0
    %526 = vmatpush.msra.mxu0 0.0
    %527 = vmatpush.msra.mxu0 0.0
    %528 = vmatpush.msra.mxu0 0.0
    %529 = vmatpush.msra.mxu0 0.0
    %530 = vmatpush.msra.mxu0 %v478
    %531 = vmatmul.f32.gmra.mxu0 %v487
    %v532 = vpop.f32.mrf.mxu0
    %v533 = vadd.f32 %v482, %v532
    %534 = vmatmul.f32.gmra.mxu0 %v490
    %v535 = vpop.f32.mrf.mxu0
    %v536 = vadd.f32 %v484, %v535
    %537 = vdwg.mxu0
    %v538 = vmul.f32 %v510, 0.5
    %v539 = vmul.f32 %v533, 0.5
    %v540 = vmul.f32 %v513, 0.5
    %v541 = vmul.f32 %v536, 0.5
    %v542 = vmul.f32 %v510, 0.70710677
    %v543 = vmul.f32 %v533, 0.70710677
    %v544 = vmul.f32 %v513, 0.70710677
    %v545 = vmul.f32 %v536, 0.70710677
    %v546 = vmul.f32 %v542, %v542
    %v547 = vmin.f32 16.0, %v546
    %v548 = vmul.f32 %v547, 2.1237322e-06
    %v549 = vadd.f32 %v548, 0.00028619796
    %v550 = vmul.f32 %v547, %v549
    %v551 = vadd.f32 %v550, 0.0036580483
    %v552 = vmul.f32 %v547, %v551
    %v553 = vadd.f32 %v552, 0.05243302
    %v554 = vmul.f32 %v547, %v553
    %v555 = vadd.f32 %v554, 0.18741608
    %v556 = vmul.f32 %v547, %v555
    %v557 = vadd.f32 %v556, 1.1283791
    %v558 = vmul.f32 %v542, %v557
    %v559 = vmul.f32 %v547, 3.8918573e-05
    %v560 = vadd.f32 %v559, 0.001143296
    %v561 = vmul.f32 %v547, %v560
    %v562 = vadd.f32 %v561, 0.014752088
    %v563 = vmul.f32 %v547, %v562
    %v564 = vadd.f32 %v563, 0.112945676
    %v565 = vmul.f32 %v547, %v564
    %v566 = vadd.f32 %v565, 0.4994258
    %v567 = vmul.f32 %v547, %v566
    %v568 = vadd.f32 %v567, 1.0
    %v569 = vrcp.pop %v568
    %v570 = vmul.f32 %v568, %v569
    %v571 = vsub.f32 1.0, %v570
    %v572 = vmul.f32 %v569, %v571
    %v573 = vadd.f32 %v569, %v572
    %vm574 = vweird.f32 %v568
    %vm575 = vweird.f32 %v569
    %vm576 = vmor %vm574, %vm575
    %v577 = vsel %vm576, %v569, %v573
    %v578 = vand.u32 2147483647, %v568
    %vm579 = vcmp.eq.f32.partialorder %v578, 8.507059e+37
    %v580 = vand.u32 %v568, 2147483648
    %v581 = vor.u32 1.1754944e-38, %v580
    %v582 = vsel %vm579, %v581, %v577
    %v583 = vmul.f32 %v558, %v582
    %v584 = vmin.f32 %v583, 1.0
    %v585 = vmax.f32 %v584, -1.0
    %v586 = vmul.f32 %v543, %v543
    %v587 = vmin.f32 16.0, %v586
    %v588 = vmul.f32 %v587, 2.1237322e-06
    %v589 = vadd.f32 %v588, 0.00028619796
    %v590 = vmul.f32 %v587, %v589
    %v591 = vadd.f32 %v590, 0.0036580483
    %v592 = vmul.f32 %v587, %v591
    %v593 = vadd.f32 %v592, 0.05243302
    %v594 = vmul.f32 %v587, %v593
    %v595 = vadd.f32 %v594, 0.18741608
    %v596 = vmul.f32 %v587, %v595
    %v597 = vadd.f32 %v596, 1.1283791
    %v598 = vmul.f32 %v543, %v597
    %v599 = vmul.f32 %v587, 3.8918573e-05
    %v600 = vadd.f32 %v599, 0.001143296
    %v601 = vmul.f32 %v587, %v600
    %v602 = vadd.f32 %v601, 0.014752088
    %v603 = vmul.f32 %v587, %v602
    %v604 = vadd.f32 %v603, 0.112945676
    %v605 = vmul.f32 %v587, %v604
    %v606 = vadd.f32 %v605, 0.4994258
    %v607 = vmul.f32 %v587, %v606
    %v608 = vadd.f32 %v607, 1.0
    %v609 = vrcp.pop %v608
    %v610 = vmul.f32 %v608, %v609
    %v611 = vsub.f32 1.0, %v610
    %v612 = vmul.f32 %v609, %v611
    %v613 = vadd.f32 %v609, %v612
    %vm614 = vweird.f32 %v608
    %vm615 = vweird.f32 %v609
    %vm616 = vmor %vm614, %vm615
    %v617 = vsel %vm616, %v609, %v613
    %v618 = vand.u32 2147483647, %v608
    %vm619 = vcmp.eq.f32.partialorder %v618, 8.507059e+37
    %v620 = vand.u32 %v608, 2147483648
    %v621 = vor.u32 1.1754944e-38, %v620
    %v622 = vsel %vm619, %v621, %v617
    %v623 = vmul.f32 %v598, %v622
    %v624 = vmin.f32 %v623, 1.0
    %v625 = vmax.f32 %v624, -1.0
    %v626 = vmul.f32 %v544, %v544
    %v627 = vmin.f32 16.0, %v626
    %v628 = vmul.f32 %v627, 2.1237322e-06
    %v629 = vadd.f32 %v628, 0.00028619796
    %v630 = vmul.f32 %v627, %v629
    %v631 = vadd.f32 %v630, 0.0036580483
    %v632 = vmul.f32 %v627, %v631
    %v633 = vadd.f32 %v632, 0.05243302
    %v634 = vmul.f32 %v627, %v633
    %v635 = vadd.f32 %v634, 0.18741608
    %v636 = vmul.f32 %v627, %v635
    %v637 = vadd.f32 %v636, 1.1283791
    %v638 = vmul.f32 %v544, %v637
    %v639 = vmul.f32 %v627, 3.8918573e-05
    %v640 = vadd.f32 %v639, 0.001143296
    %v641 = vmul.f32 %v627, %v640
    %v642 = vadd.f32 %v641, 0.014752088
    %v643 = vmul.f32 %v627, %v642
    %v644 = vadd.f32 %v643, 0.112945676
    %v645 = vmul.f32 %v627, %v644
    %v646 = vadd.f32 %v645, 0.4994258
    %v647 = vmul.f32 %v627, %v646
    %v648 = vadd.f32 %v647, 1.0
    %v649 = vrcp.pop %v648
    %v650 = vmul.f32 %v648, %v649
    %v651 = vsub.f32 1.0, %v650
    %v652 = vmul.f32 %v649, %v651
    %v653 = vadd.f32 %v649, %v652
    %vm654 = vweird.f32 %v648
    %vm655 = vweird.f32 %v649
    %vm656 = vmor %vm654, %vm655
    %v657 = vsel %vm656, %v649, %v653
    %v658 = vand.u32 2147483647, %v648
    %vm659 = vcmp.eq.f32.partialorder %v658, 8.507059e+37
    %v660 = vand.u32 %v648, 2147483648
    %v661 = vor.u32 1.1754944e-38, %v660
    %v662 = vsel %vm659, %v661, %v657
    %v663 = vmul.f32 %v638, %v662
    %v664 = vmin.f32 %v663, 1.0
    %v665 = vmax.f32 %v664, -1.0
    %v666 = vmul.f32 %v545, %v545
    %v667 = vmin.f32 16.0, %v666
    %v668 = vmul.f32 %v667, 2.1237322e-06
    %v669 = vadd.f32 %v668, 0.00028619796
    %v670 = vmul.f32 %v667, %v669
    %v671 = vadd.f32 %v670, 0.0036580483
    %v672 = vmul.f32 %v667, %v671
    %v673 = vadd.f32 %v672, 0.05243302
    %v674 = vmul.f32 %v667, %v673
    %v675 = vadd.f32 %v674, 0.18741608
    %v676 = vmul.f32 %v667, %v675
    %v677 = vadd.f32 %v676, 1.1283791
    %v678 = vmul.f32 %v545, %v677
    %v679 = vmul.f32 %v667, 3.8918573e-05
    %v680 = vadd.f32 %v679, 0.001143296
    %v681 = vmul.f32 %v667, %v680
    %v682 = vadd.f32 %v681, 0.014752088
    %v683 = vmul.f32 %v667, %v682
    %v684 = vadd.f32 %v683, 0.112945676
    %v685 = vmul.f32 %v667, %v684
    %v686 = vadd.f32 %v685, 0.4994258
    %v687 = vmul.f32 %v667, %v686
    %v688 = vadd.f32 %v687, 1.0
    %v689 = vrcp.pop %v688
    %v690 = vmul.f32 %v688, %v689
    %v691 = vsub.f32 1.0, %v690
    %v692 = vmul.f32 %v689, %v691
    %v693 = vadd.f32 %v689, %v692
    %vm694 = vweird.f32 %v688
    %vm695 = vweird.f32 %v689
    %vm696 = vmor %vm694, %vm695
    %v697 = vsel %vm696, %v689, %v693
    %v698 = vand.u32 2147483647, %v688
    %vm699 = vcmp.eq.f32.partialorder %v698, 8.507059e+37
    %v700 = vand.u32 %v688, 2147483648
    %v701 = vor.u32 1.1754944e-38, %v700
    %v702 = vsel %vm699, %v701, %v697
    %v703 = vmul.f32 %v678, %v702
    %v704 = vmin.f32 %v703, 1.0
    %v705 = vmax.f32 %v704, -1.0
    %v706 = vadd.f32 %v585, 1.0
    %v707 = vadd.f32 %v625, 1.0
    %v708 = vadd.f32 %v665, 1.0
    %v709 = vadd.f32 %v705, 1.0
    %v710 = vmul.f32 %v538, %v706
    %v711 = vmul.f32 %v539, %v707
    %v712 = vmul.f32 %v540, %v708
    %v713 = vmul.f32 %v541, %v709
    %v714 = vld [vmem:[#allocation14] sm:$0xff]
    %v715 = vld [vmem:[#allocation16] sm:$0xff]
    %v716 = vld [vmem:[#allocation16 + $0x8] sm:$0xff]
    %vm717 = vcmask 130048
    %v719 = vsel %vm717, %v714, 0
    %721 = vmatpush.msra.mxu0 0.0
    %722 = vmatpush.msra.mxu0 0.0
    %723 = vmatpush.msra.mxu0 0.0
    %724 = vmatpush.msra.mxu0 0.0
    %725 = vmatpush.msra.mxu0 0.0
    %726 = vmatpush.msra.mxu0 0.0
    %727 = vmatpush.msra.mxu0 0.0
    %728 = vmatpush.msra.mxu0 0.0
    %729 = vmatpush.msra.mxu0 0.0
    %730 = vmatpush.msra.mxu0 0.0
    %731 = vmatpush.msra.mxu0 0.0
    %732 = vmatpush.msra.mxu0 0.0
    %733 = vmatpush.msra.mxu0 0.0
    %734 = vmatpush.msra.mxu0 0.0
    %735 = vmatpush.msra.mxu0 %v712
    %736 = vmatpush.msra.mxu0 %v710
    %737 = vmatmul.f32.gmra.mxu0 %v719
    %v738 = vpop.f32.mrf.mxu0
    %v739 = vadd.f32 %v715, %v738
    %740 = vdwg.mxu0
    %741 = vmatpush.msra.mxu0 0.0
    %742 = vmatpush.msra.mxu0 0.0
    %743 = vmatpush.msra.mxu0 0.0
    %744 = vmatpush.msra.mxu0 0.0
    %745 = vmatpush.msra.mxu0 0.0
    %746 = vmatpush.msra.mxu0 0.0
    %747 = vmatpush.msra.mxu0 0.0
    %748 = vmatpush.msra.mxu0 0.0
    %749 = vmatpush.msra.mxu0 0.0
    %750 = vmatpush.msra.mxu0 0.0
    %751 = vmatpush.msra.mxu0 0.0
    %752 = vmatpush.msra.mxu0 0.0
    %753 = vmatpush.msra.mxu0 0.0
    %754 = vmatpush.msra.mxu0 0.0
    %755 = vmatpush.msra.mxu0 %v713
    %756 = vmatpush.msra.mxu0 %v711
    %757 = vmatmul.f32.gmra.mxu0 %v719
    %v758 = vpop.f32.mrf.mxu0
    %v759 = vadd.f32 %v716, %v758
    %760 = vdwg.mxu0
    %v761 = vld [vmem:[#allocation10] sm:$0xff]
    %v762 = vld [vmem:[#allocation10 + $0x8] sm:$0xff]
    %v763 = vld [vmem:[#allocation11] sm:$0xff]
    %v764 = vld [vmem:[#allocation11 + $0x8] sm:$0xff]
    %765 = vmatpush.msra.mxu0 %v251
    %766 = vmatpush.msra.mxu0 %v249
    %767 = vmatpush.msra.mxu0 %v247
    %768 = vmatpush.msra.mxu0 %v245
    %769 = vmatpush.msra.mxu0 %v243
    %770 = vmatpush.msra.mxu0 %v241
    %771 = vmatpush.msra.mxu0 %v239
    %772 = vmatpush.msra.mxu0 %v237
    %773 = vmatpush.msra.mxu0 %v235
    %774 = vmatpush.msra.mxu0 %v233
    %775 = vmatpush.msra.mxu0 %v231
    %776 = vmatpush.msra.mxu0 %v229
    %777 = vmatpush.msra.mxu0 %v227
    %778 = vmatpush.msra.mxu0 %v225
    %779 = vmatpush.msra.mxu0 %v223
    %780 = vmatpush.msra.mxu0 %v221
    %781 = vmatmul.f32.gmra.mxu0 %v739
    %v782 = vpop.f32.mrf.mxu0
    %v783 = vadd.f32 0.0, %v782
    %784 = vdwg.mxu0
    %785 = vmatpush.msra.mxu0 %v283
    %786 = vmatpush.msra.mxu0 %v281
    %787 = vmatpush.msra.mxu0 %v279
    %788 = vmatpush.msra.mxu0 %v277
    %789 = vmatpush.msra.mxu0 %v275
    %790 = vmatpush.msra.mxu0 %v273
    %791 = vmatpush.msra.mxu0 %v271
    %792 = vmatpush.msra.mxu0 %v269
    %793 = vmatpush.msra.mxu0 %v267
    %794 = vmatpush.msra.mxu0 %v265
    %795 = vmatpush.msra.mxu0 %v263
    %796 = vmatpush.msra.mxu0 %v261
    %797 = vmatpush.msra.mxu0 %v259
    %798 = vmatpush.msra.mxu0 %v257
    %799 = vmatpush.msra.mxu0 %v255
    %800 = vmatpush.msra.mxu0 %v253
    %801 = vmatmul.f32.gmra.mxu0 %v759
    %v802 = vpop.f32.mrf.mxu0
    %v803 = vadd.f32 %v783, %v802
    %804 = vdwg.mxu0
    %805 = vmatpush.msra.mxu0 %v252
    %806 = vmatpush.msra.mxu0 %v250
    %807 = vmatpush.msra.mxu0 %v248
    %808 = vmatpush.msra.mxu0 %v246
    %809 = vmatpush.msra.mxu0 %v244
    %810 = vmatpush.msra.mxu0 %v242
    %811 = vmatpush.msra.mxu0 %v240
    %812 = vmatpush.msra.mxu0 %v238
    %813 = vmatpush.msra.mxu0 %v236
    %814 = vmatpush.msra.mxu0 %v234
    %815 = vmatpush.msra.mxu0 %v232
    %816 = vmatpush.msra.mxu0 %v230
    %817 = vmatpush.msra.mxu0 %v228
    %818 = vmatpush.msra.mxu0 %v226
    %819 = vmatpush.msra.mxu0 %v224
    %820 = vmatpush.msra.mxu0 %v222
    %821 = vmatmul.f32.gmra.mxu0 %v739
    %v822 = vpop.f32.mrf.mxu0
    %v823 = vadd.f32 0.0, %v822
    %824 = vdwg.mxu0
    %825 = vmatpush.msra.mxu0 %v284
    %826 = vmatpush.msra.mxu0 %v282
    %827 = vmatpush.msra.mxu0 %v280
    %828 = vmatpush.msra.mxu0 %v278
    %829 = vmatpush.msra.mxu0 %v276
    %830 = vmatpush.msra.mxu0 %v274
    %831 = vmatpush.msra.mxu0 %v272
    %832 = vmatpush.msra.mxu0 %v270
    %833 = vmatpush.msra.mxu0 %v268
    %834 = vmatpush.msra.mxu0 %v266
    %835 = vmatpush.msra.mxu0 %v264
    %836 = vmatpush.msra.mxu0 %v262
    %837 = vmatpush.msra.mxu0 %v260
    %838 = vmatpush.msra.mxu0 %v258
    %839 = vmatpush.msra.mxu0 %v256
    %840 = vmatpush.msra.mxu0 %v254
    %841 = vmatmul.f32.gmra.mxu0 %v759
    %v842 = vpop.f32.mrf.mxu0
    %v843 = vadd.f32 %v823, %v842
    %844 = vdwg.mxu0
    %v845 = vsub.f32 %v739, %v803
    %v846 = vsub.f32 %v759, %v843
    %v847 = vmul.f32 %v845, %v845
    %v848 = vmul.f32 %v846, %v846
    %849 = vmatpush.msra.mxu0 %v251
    %850 = vmatpush.msra.mxu0 %v249
    %851 = vmatpush.msra.mxu0 %v247
    %852 = vmatpush.msra.mxu0 %v245
    %853 = vmatpush.msra.mxu0 %v243
    %854 = vmatpush.msra.mxu0 %v241
    %855 = vmatpush.msra.mxu0 %v239
    %856 = vmatpush.msra.mxu0 %v237
    %857 = vmatpush.msra.mxu0 %v235
    %858 = vmatpush.msra.mxu0 %v233
    %859 = vmatpush.msra.mxu0 %v231
    %860 = vmatpush.msra.mxu0 %v229
    %861 = vmatpush.msra.mxu0 %v227
    %862 = vmatpush.msra.mxu0 %v225
    %863 = vmatpush.msra.mxu0 %v223
    %864 = vmatpush.msra.mxu0 %v221
    %865 = vmatmul.f32.gmra.mxu0 %v847
    %v866 = vpop.f32.mrf.mxu0
    %v867 = vadd.f32 1e-05, %v866
    %868 = vdwg.mxu0
    %869 = vmatpush.msra.mxu0 %v283
    %870 = vmatpush.msra.mxu0 %v281
    %871 = vmatpush.msra.mxu0 %v279
    %872 = vmatpush.msra.mxu0 %v277
    %873 = vmatpush.msra.mxu0 %v275
    %874 = vmatpush.msra.mxu0 %v273
    %875 = vmatpush.msra.mxu0 %v271
    %876 = vmatpush.msra.mxu0 %v269
    %877 = vmatpush.msra.mxu0 %v267
    %878 = vmatpush.msra.mxu0 %v265
    %879 = vmatpush.msra.mxu0 %v263
    %880 = vmatpush.msra.mxu0 %v261
    %881 = vmatpush.msra.mxu0 %v259
    %882 = vmatpush.msra.mxu0 %v257
    %883 = vmatpush.msra.mxu0 %v255
    %884 = vmatpush.msra.mxu0 %v253
    %885 = vmatmul.f32.gmra.mxu0 %v848
    %v886 = vpop.f32.mrf.mxu0
    %v887 = vadd.f32 %v867, %v886
    %888 = vdwg.mxu0
    %889 = vmatpush.msra.mxu0 %v252
    %890 = vmatpush.msra.mxu0 %v250
    %891 = vmatpush.msra.mxu0 %v248
    %892 = vmatpush.msra.mxu0 %v246
    %893 = vmatpush.msra.mxu0 %v244
    %894 = vmatpush.msra.mxu0 %v242
    %895 = vmatpush.msra.mxu0 %v240
    %896 = vmatpush.msra.mxu0 %v238
    %897 = vmatpush.msra.mxu0 %v236
    %898 = vmatpush.msra.mxu0 %v234
    %899 = vmatpush.msra.mxu0 %v232
    %900 = vmatpush.msra.mxu0 %v230
    %901 = vmatpush.msra.mxu0 %v228
    %902 = vmatpush.msra.mxu0 %v226
    %903 = vmatpush.msra.mxu0 %v224
    %904 = vmatpush.msra.mxu0 %v222
    %905 = vmatmul.f32.gmra.mxu0 %v847
    %v906 = vpop.f32.mrf.mxu0
    %v907 = vadd.f32 1e-05, %v906
    %908 = vdwg.mxu0
    %909 = vmatpush.msra.mxu0 %v284
    %910 = vmatpush.msra.mxu0 %v282
    %911 = vmatpush.msra.mxu0 %v280
    %912 = vmatpush.msra.mxu0 %v278
    %913 = vmatpush.msra.mxu0 %v276
    %914 = vmatpush.msra.mxu0 %v274
    %915 = vmatpush.msra.mxu0 %v272
    %916 = vmatpush.msra.mxu0 %v270
    %917 = vmatpush.msra.mxu0 %v268
    %918 = vmatpush.msra.mxu0 %v266
    %919 = vmatpush.msra.mxu0 %v264
    %920 = vmatpush.msra.mxu0 %v262
    %921 = vmatpush.msra.mxu0 %v260
    %922 = vmatpush.msra.mxu0 %v258
    %923 = vmatpush.msra.mxu0 %v256
    %924 = vmatpush.msra.mxu0 %v254
    %925 = vmatmul.f32.gmra.mxu0 %v848
    %v926 = vpop.f32.mrf.mxu0
    %v927 = vadd.f32 %v907, %v926
    %928 = vdwg.mxu0
    %v929 = vrsqrt.pop %v887
    %v930 = vmul.f32 %v929, %v887
    %v931 = vmul.f32 %v930, %v929
    %v932 = vmul.f32 0.5, %v931
    %v933 = vsub.f32 1.5, %v932
    %v934 = vmul.f32 %v929, %v933
    %vm935 = vweird.f32 %v887
    %vm936 = vweird.f32 %v929
    %vm937 = vmor %vm935, %vm936
    %v938 = vsel %vm937, %v929, %v934
    %v939 = vrsqrt.pop %v927
    %v940 = vmul.f32 %v939, %v927
    %v941 = vmul.f32 %v940, %v939
    %v942 = vmul.f32 0.5, %v941
    %v943 = vsub.f32 1.5, %v942
    %v944 = vmul.f32 %v939, %v943
    %vm945 = vweird.f32 %v927
    %vm946 = vweird.f32 %v939
    %vm947 = vmor %vm945, %vm946
    %v948 = vsel %vm947, %v939, %v944
    %v949 = vmul.f32 %v845, %v938
    %v950 = vmul.f32 %v846, %v948
    %v951 = vmul.f32 %v949, %v761
    %v952 = vmul.f32 %v950, %v762
    %v953 = vadd.f32 %v951, %v763
    %v954 = vadd.f32 %v952, %v764
    %v955 = vld [vmem:[#allocation17] sm:$0xff]
    %v956 = vld [vmem:[#allocation17 + $0x8] sm:$0xff]
    %v957 = vld [vmem:[#allocation17 + $0x10] sm:$0xff]
    %v958 = vld [vmem:[#allocation17 + $0x18] sm:$0xff]
    %v959 = vld [vmem:[#allocation17 + $0x20] sm:$0xff]
    %v960 = vld [vmem:[#allocation17 + $0x28] sm:$0xff]
    %v961 = vld [vmem:[#allocation17 + $0x30] sm:$0xff]
    %v962 = vld [vmem:[#allocation17 + $0x38] sm:$0xff]
    %v963 = vld [vmem:[#allocation17 + $0x40] sm:$0xff]
    %v964 = vld [vmem:[#allocation17 + $0x48] sm:$0xff]
    %v965 = vld [vmem:[#allocation17 + $0x50] sm:$0xff]
    %v966 = vld [vmem:[#allocation17 + $0x58] sm:$0xff]
    %v967 = vld [vmem:[#allocation17 + $0x60] sm:$0xff]
    %v968 = vld [vmem:[#allocation17 + $0x68] sm:$0xff]
    %v969 = vld [vmem:[#allocation17 + $0x70] sm:$0xff]
    %v970 = vld [vmem:[#allocation17 + $0x78] sm:$0xff]
    %v971 = vld [vmem:[#allocation17 + $0x80] sm:$0xff]
    %v972 = vld [vmem:[#allocation17 + $0x88] sm:$0xff]
    %v973 = vld [vmem:[#allocation17 + $0x90] sm:$0xff]
    %v974 = vld [vmem:[#allocation17 + $0x98] sm:$0xff]
    %v975 = vld [vmem:[#allocation17 + $0xa0] sm:$0xff]
    %v976 = vld [vmem:[#allocation17 + $0xa8] sm:$0xff]
    %v977 = vld [vmem:[#allocation17 + $0xb0] sm:$0xff]
    %v978 = vld [vmem:[#allocation17 + $0xb8] sm:$0xff]
    %v979 = vld [vmem:[#allocation17 + $0xc0] sm:$0xff]
    %v980 = vld [vmem:[#allocation17 + $0xc8] sm:$0xff]
    %v981 = vld [vmem:[#allocation17 + $0xd0] sm:$0xff]
    %v982 = vld [vmem:[#allocation17 + $0xd8] sm:$0xff]
    %v983 = vld [vmem:[#allocation17 + $0xe0] sm:$0xff]
    %v984 = vld [vmem:[#allocation17 + $0xe8] sm:$0xff]
    %v985 = vld [vmem:[#allocation17 + $0xf0] sm:$0xff]
    %v986 = vld [vmem:[#allocation17 + $0xf8] sm:$0xff]
    %v987 = vld [vmem:[#allocation17 + $0x100] sm:$0xff]
    %v988 = vld [vmem:[#allocation17 + $0x108] sm:$0xff]
    %v989 = vld [vmem:[#allocation17 + $0x110] sm:$0xff]
    %v990 = vld [vmem:[#allocation17 + $0x118] sm:$0xff]
    %v991 = vld [vmem:[#allocation17 + $0x120] sm:$0xff]
    %v992 = vld [vmem:[#allocation17 + $0x128] sm:$0xff]
    %v993 = vld [vmem:[#allocation17 + $0x130] sm:$0xff]
    %v994 = vld [vmem:[#allocation17 + $0x138] sm:$0xff]
    %v995 = vld [vmem:[#allocation17 + $0x140] sm:$0xff]
    %v996 = vld [vmem:[#allocation17 + $0x148] sm:$0xff]
    %v997 = vld [vmem:[#allocation17 + $0x150] sm:$0xff]
    %v998 = vld [vmem:[#allocation17 + $0x158] sm:$0xff]
    %v999 = vld [vmem:[#allocation17 + $0x160] sm:$0xff]
    %v1000 = vld [vmem:[#allocation17 + $0x168] sm:$0xff]
    %v1001 = vld [vmem:[#allocation17 + $0x170] sm:$0xff]
    %v1002 = vld [vmem:[#allocation17 + $0x178] sm:$0xff]
    %v1003 = vld [vmem:[#allocation17 + $0x180] sm:$0xff]
    %v1004 = vld [vmem:[#allocation17 + $0x188] sm:$0xff]
    %v1005 = vld [vmem:[#allocation17 + $0x190] sm:$0xff]
    %v1006 = vld [vmem:[#allocation17 + $0x198] sm:$0xff]
    %v1007 = vld [vmem:[#allocation17 + $0x1a0] sm:$0xff]
    %v1008 = vld [vmem:[#allocation17 + $0x1a8] sm:$0xff]
    %v1009 = vld [vmem:[#allocation17 + $0x1b0] sm:$0xff]
    %v1010 = vld [vmem:[#allocation17 + $0x1b8] sm:$0xff]
    %v1011 = vld [vmem:[#allocation17 + $0x1c0] sm:$0xff]
    %v1012 = vld [vmem:[#allocation17 + $0x1c8] sm:$0xff]
    %v1013 = vld [vmem:[#allocation17 + $0x1d0] sm:$0xff]
    %v1014 = vld [vmem:[#allocation17 + $0x1d8] sm:$0xff]
    %v1015 = vld [vmem:[#allocation17 + $0x1e0] sm:$0xff]
    %v1016 = vld [vmem:[#allocation17 + $0x1e8] sm:$0xff]
    %v1017 = vld [vmem:[#allocation17 + $0x1f0] sm:$0xff]
    %v1018 = vld [vmem:[#allocation17 + $0x1f8] sm:$0xff]
    %v1019 = vld [vmem:[#allocation17 + $0x200] sm:$0xff]
    %v1020 = vld [vmem:[#allocation17 + $0x208] sm:$0xff]
    %v1021 = vld [vmem:[#allocation17 + $0x210] sm:$0xff]
    %v1022 = vld [vmem:[#allocation17 + $0x218] sm:$0xff]
    %v1023 = vld [vmem:[#allocation17 + $0x220] sm:$0xff]
    %v1024 = vld [vmem:[#allocation17 + $0x228] sm:$0xff]
    %v1025 = vld [vmem:[#allocation17 + $0x230] sm:$0xff]
    %v1026 = vld [vmem:[#allocation17 + $0x238] sm:$0xff]
    %v1027 = vld [vmem:[#allocation17 + $0x240] sm:$0xff]
    %v1028 = vld [vmem:[#allocation17 + $0x248] sm:$0xff]
    %v1029 = vld [vmem:[#allocation17 + $0x250] sm:$0xff]
    %v1030 = vld [vmem:[#allocation17 + $0x258] sm:$0xff]
    %v1031 = vld [vmem:[#allocation17 + $0x260] sm:$0xff]
    %v1032 = vld [vmem:[#allocation17 + $0x268] sm:$0xff]
    %v1033 = vld [vmem:[#allocation17 + $0x270] sm:$0xff]
    %v1034 = vld [vmem:[#allocation17 + $0x278] sm:$0xff]
    %v1035 = vld [vmem:[#allocation17 + $0x280] sm:$0xff]
    %v1036 = vld [vmem:[#allocation17 + $0x288] sm:$0xff]
    %v1037 = vld [vmem:[#allocation17 + $0x290] sm:$0xff]
    %v1038 = vld [vmem:[#allocation17 + $0x298] sm:$0xff]
    %v1039 = vld [vmem:[#allocation17 + $0x2a0] sm:$0xff]
    %v1040 = vld [vmem:[#allocation17 + $0x2a8] sm:$0xff]
    %v1041 = vld [vmem:[#allocation17 + $0x2b0] sm:$0xff]
    %v1042 = vld [vmem:[#allocation17 + $0x2b8] sm:$0xff]
    %v1043 = vld [vmem:[#allocation17 + $0x2c0] sm:$0xff]
    %v1044 = vld [vmem:[#allocation17 + $0x2c8] sm:$0xff]
    %v1045 = vld [vmem:[#allocation17 + $0x2d0] sm:$0xff]
    %v1046 = vld [vmem:[#allocation17 + $0x2d8] sm:$0xff]
    %v1047 = vld [vmem:[#allocation17 + $0x2e0] sm:$0xff]
    %v1048 = vld [vmem:[#allocation17 + $0x2e8] sm:$0xff]
    %v1049 = vld [vmem:[#allocation17 + $0x2f0] sm:$0xff]
    %v1050 = vld [vmem:[#allocation17 + $0x2f8] sm:$0xff]
    %v1051 = vld [vmem:[#allocation17 + $0x300] sm:$0xff]
    %v1052 = vld [vmem:[#allocation17 + $0x308] sm:$0xff]
    %v1053 = vld [vmem:[#allocation17 + $0x310] sm:$0xff]
    %v1054 = vld [vmem:[#allocation17 + $0x318] sm:$0xff]
    %v1055 = vld [vmem:[#allocation17 + $0x320] sm:$0xff]
    %v1056 = vld [vmem:[#allocation17 + $0x328] sm:$0xff]
    %v1057 = vld [vmem:[#allocation17 + $0x330] sm:$0xff]
    %v1058 = vld [vmem:[#allocation17 + $0x338] sm:$0xff]
    %v1059 = vld [vmem:[#allocation17 + $0x340] sm:$0xff]
    %v1060 = vld [vmem:[#allocation17 + $0x348] sm:$0xff]
    %v1061 = vld [vmem:[#allocation17 + $0x350] sm:$0xff]
    %v1062 = vld [vmem:[#allocation17 + $0x358] sm:$0xff]
    %v1063 = vld [vmem:[#allocation17 + $0x360] sm:$0xff]
    %v1064 = vld [vmem:[#allocation17 + $0x368] sm:$0xff]
    %v1065 = vld [vmem:[#allocation17 + $0x370] sm:$0xff]
    %v1066 = vld [vmem:[#allocation17 + $0x378] sm:$0xff]
    %v1067 = vld [vmem:[#allocation17 + $0x380] sm:$0xff]
    %v1068 = vld [vmem:[#allocation17 + $0x388] sm:$0xff]
    %v1069 = vld [vmem:[#allocation17 + $0x390] sm:$0xff]
    %v1070 = vld [vmem:[#allocation17 + $0x398] sm:$0xff]
    %v1071 = vld [vmem:[#allocation17 + $0x3a0] sm:$0xff]
    %v1072 = vld [vmem:[#allocation17 + $0x3a8] sm:$0xff]
    %v1073 = vld [vmem:[#allocation17 + $0x3b0] sm:$0xff]
    %v1074 = vld [vmem:[#allocation17 + $0x3b8] sm:$0xff]
    %v1075 = vld [vmem:[#allocation17 + $0x3c0] sm:$0xff]
    %v1076 = vld [vmem:[#allocation17 + $0x3c8] sm:$0xff]
    %v1077 = vld [vmem:[#allocation17 + $0x3d0] sm:$0xff]
    %v1078 = vld [vmem:[#allocation17 + $0x3d8] sm:$0xff]
    %v1079 = vld [vmem:[#allocation17 + $0x3e0] sm:$0xff]
    %v1080 = vld [vmem:[#allocation17 + $0x3e8] sm:$0xff]
    %v1081 = vld [vmem:[#allocation17 + $0x3f0] sm:$0xff]
    %v1082 = vld [vmem:[#allocation17 + $0x3f8] sm:$0xff]
    %v1083 = vld [vmem:[%s11] sm:$0xff]
    %v1084 = vld [vmem:[%s11 + $0x8] sm:$0xff]
    %v1085 = vld [vmem:[%s11 + $0x10] sm:$0xff]
    %v1086 = vld [vmem:[%s11 + $0x18] sm:$0xff]
    %1087 = vmatpush.msra.mxu0 %v1015
    %1088 = vmatpush.msra.mxu0 %v1011
    %1089 = vmatpush.msra.mxu0 %v1007
    %1090 = vmatpush.msra.mxu0 %v1003
    %1091 = vmatpush.msra.mxu0 %v999
    %1092 = vmatpush.msra.mxu0 %v995
    %1093 = vmatpush.msra.mxu0 %v991
    %1094 = vmatpush.msra.mxu0 %v987
    %1095 = vmatpush.msra.mxu0 %v983
    %1096 = vmatpush.msra.mxu0 %v979
    %1097 = vmatpush.msra.mxu0 %v975
    %1098 = vmatpush.msra.mxu0 %v971
    %1099 = vmatpush.msra.mxu0 %v967
    %1100 = vmatpush.msra.mxu0 %v963
    %1101 = vmatpush.msra.mxu0 %v959
    %1102 = vmatpush.msra.mxu0 %v955
    %1103 = vmatmul.f32.gmra.mxu0 %v953
    %v1104 = vpop.f32.mrf.mxu0
    %v1105 = vadd.f32 %v1083, %v1104
    %1106 = vdwg.mxu0
    %1107 = vmatpush.msra.mxu0 %v1079
    %1108 = vmatpush.msra.mxu0 %v1075
    %1109 = vmatpush.msra.mxu0 %v1071
    %1110 = vmatpush.msra.mxu0 %v1067
    %1111 = vmatpush.msra.mxu0 %v1063
    %1112 = vmatpush.msra.mxu0 %v1059
    %1113 = vmatpush.msra.mxu0 %v1055
    %1114 = vmatpush.msra.mxu0 %v1051
    %1115 = vmatpush.msra.mxu0 %v1047
    %1116 = vmatpush.msra.mxu0 %v1043
    %1117 = vmatpush.msra.mxu0 %v1039
    %1118 = vmatpush.msra.mxu0 %v1035
    %1119 = vmatpush.msra.mxu0 %v1031
    %1120 = vmatpush.msra.mxu0 %v1027
    %1121 = vmatpush.msra.mxu0 %v1023
    %1122 = vmatpush.msra.mxu0 %v1019
    %1123 = vmatmul.f32.gmra.mxu0 %v954
    %v1124 = vpop.f32.mrf.mxu0
    %v1125 = vadd.f32 %v1105, %v1124
    %1126 = vdwg.mxu0
    %1127 = vmatpush.msra.mxu0 %v1016
    %1128 = vmatpush.msra.mxu0 %v1012
    %1129 = vmatpush.msra.mxu0 %v1008
    %1130 = vmatpush.msra.mxu0 %v1004
    %1131 = vmatpush.msra.mxu0 %v1000
    %1132 = vmatpush.msra.mxu0 %v996
    %1133 = vmatpush.msra.mxu0 %v992
    %1134 = vmatpush.msra.mxu0 %v988
    %1135 = vmatpush.msra.mxu0 %v984
    %1136 = vmatpush.msra.mxu0 %v980
    %1137 = vmatpush.msra.mxu0 %v976
    %1138 = vmatpush.msra.mxu0 %v972
    %1139 = vmatpush.msra.mxu0 %v968
    %1140 = vmatpush.msra.mxu0 %v964
    %1141 = vmatpush.msra.mxu0 %v960
    %1142 = vmatpush.msra.mxu0 %v956
    %1143 = vmatmul.f32.gmra.mxu0 %v953
    %v1144 = vpop.f32.mrf.mxu0
    %v1145 = vadd.f32 %v1084, %v1144
    %1146 = vdwg.mxu0
    %1147 = vmatpush.msra.mxu0 %v1080
    %1148 = vmatpush.msra.mxu0 %v1076
    %1149 = vmatpush.msra.mxu0 %v1072
    %1150 = vmatpush.msra.mxu0 %v1068
    %1151 = vmatpush.msra.mxu0 %v1064
    %1152 = vmatpush.msra.mxu0 %v1060
    %1153 = vmatpush.msra.mxu0 %v1056
    %1154 = vmatpush.msra.mxu0 %v1052
    %1155 = vmatpush.msra.mxu0 %v1048
    %1156 = vmatpush.msra.mxu0 %v1044
    %1157 = vmatpush.msra.mxu0 %v1040
    %1158 = vmatpush.msra.mxu0 %v1036
    %1159 = vmatpush.msra.mxu0 %v1032
    %1160 = vmatpush.msra.mxu0 %v1028
    %1161 = vmatpush.msra.mxu0 %v1024
    %1162 = vmatpush.msra.mxu0 %v1020
    %1163 = vmatmul.f32.gmra.mxu0 %v954
    %v1164 = vpop.f32.mrf.mxu0
    %v1165 = vadd.f32 %v1145, %v1164
    %1166 = vdwg.mxu0
    %1167 = vmatpush.msra.mxu0 %v1017
    %1168 = vmatpush.msra.mxu0 %v1013
    %1169 = vmatpush.msra.mxu0 %v1009
    %1170 = vmatpush.msra.mxu0 %v1005
    %1171 = vmatpush.msra.mxu0 %v1001
    %1172 = vmatpush.msra.mxu0 %v997
    %1173 = vmatpush.msra.mxu0 %v993
    %1174 = vmatpush.msra.mxu0 %v989
    %1175 = vmatpush.msra.mxu0 %v985
    %1176 = vmatpush.msra.mxu0 %v981
    %1177 = vmatpush.msra.mxu0 %v977
    %1178 = vmatpush.msra.mxu0 %v973
    %1179 = vmatpush.msra.mxu0 %v969
    %1180 = vmatpush.msra.mxu0 %v965
    %1181 = vmatpush.msra.mxu0 %v961
    %1182 = vmatpush.msra.mxu0 %v957
    %1183 = vmatmul.f32.gmra.mxu0 %v953
    %v1184 = vpop.f32.mrf.mxu0
    %v1185 = vadd.f32 %v1085, %v1184
    %1186 = vdwg.mxu0
    %1187 = vmatpush.msra.mxu0 %v1081
    %1188 = vmatpush.msra.mxu0 %v1077
    %1189 = vmatpush.msra.mxu0 %v1073
    %1190 = vmatpush.msra.mxu0 %v1069
    %1191 = vmatpush.msra.mxu0 %v1065
    %1192 = vmatpush.msra.mxu0 %v1061
    %1193 = vmatpush.msra.mxu0 %v1057
    %1194 = vmatpush.msra.mxu0 %v1053
    %1195 = vmatpush.msra.mxu0 %v1049
    %1196 = vmatpush.msra.mxu0 %v1045
    %1197 = vmatpush.msra.mxu0 %v1041
    %1198 = vmatpush.msra.mxu0 %v1037
    %1199 = vmatpush.msra.mxu0 %v1033
    %1200 = vmatpush.msra.mxu0 %v1029
    %1201 = vmatpush.msra.mxu0 %v1025
    %1202 = vmatpush.msra.mxu0 %v1021
    %1203 = vmatmul.f32.gmra.mxu0 %v954
    %v1204 = vpop.f32.mrf.mxu0
    %v1205 = vadd.f32 %v1185, %v1204
    %1206 = vdwg.mxu0
    %1207 = vmatpush.msra.mxu0 %v1018
    %1208 = vmatpush.msra.mxu0 %v1014
    %1209 = vmatpush.msra.mxu0 %v1010
    %1210 = vmatpush.msra.mxu0 %v1006
    %1211 = vmatpush.msra.mxu0 %v1002
    %1212 = vmatpush.msra.mxu0 %v998
    %1213 = vmatpush.msra.mxu0 %v994
    %1214 = vmatpush.msra.mxu0 %v990
    %1215 = vmatpush.msra.mxu0 %v986
    %1216 = vmatpush.msra.mxu0 %v982
    %1217 = vmatpush.msra.mxu0 %v978
    %1218 = vmatpush.msra.mxu0 %v974
    %1219 = vmatpush.msra.mxu0 %v970
    %1220 = vmatpush.msra.mxu0 %v966
    %1221 = vmatpush.msra.mxu0 %v962
    %1222 = vmatpush.msra.mxu0 %v958
    %1223 = vmatmul.f32.gmra.mxu0 %v953
    %v1224 = vpop.f32.mrf.mxu0
    %v1225 = vadd.f32 %v1086, %v1224
    %1226 = vdwg.mxu0
    %1227 = vmatpush.msra.mxu0 %v1082
    %1228 = vmatpush.msra.mxu0 %v1078
    %1229 = vmatpush.msra.mxu0 %v1074
    %1230 = vmatpush.msra.mxu0 %v1070
    %1231 = vmatpush.msra.mxu0 %v1066
    %1232 = vmatpush.msra.mxu0 %v1062
    %1233 = vmatpush.msra.mxu0 %v1058
    %1234 = vmatpush.msra.mxu0 %v1054
    %1235 = vmatpush.msra.mxu0 %v1050
    %1236 = vmatpush.msra.mxu0 %v1046
    %1237 = vmatpush.msra.mxu0 %v1042
    %1238 = vmatpush.msra.mxu0 %v1038
    %1239 = vmatpush.msra.mxu0 %v1034
    %1240 = vmatpush.msra.mxu0 %v1030
    %1241 = vmatpush.msra.mxu0 %v1026
    %1242 = vmatpush.msra.mxu0 %v1022
    %1243 = vmatmul.f32.gmra.mxu0 %v954
    %v1244 = vpop.f32.mrf.mxu0
    %v1245 = vadd.f32 %v1225, %v1244
    %1246 = vdwg.mxu0
    %v1247 = vmul.f32 %v1125, 0.5
    %v1248 = vmul.f32 %v1165, 0.5
    %v1249 = vmul.f32 %v1205, 0.5
    %v1250 = vmul.f32 %v1245, 0.5
    %v1251 = vmul.f32 %v1125, 0.70710677
    %v1252 = vmul.f32 %v1165, 0.70710677
    %v1253 = vmul.f32 %v1205, 0.70710677
    %v1254 = vmul.f32 %v1245, 0.70710677
    %v1255 = vmul.f32 %v1251, %v1251
    %v1256 = vmin.f32 16.0, %v1255
    %v1257 = vmul.f32 %v1256, 2.1237322e-06
    %v1258 = vadd.f32 %v1257, 0.00028619796
    %v1259 = vmul.f32 %v1256, %v1258
    %v1260 = vadd.f32 %v1259, 0.0036580483
    %v1261 = vmul.f32 %v1256, %v1260
    %v1262 = vadd.f32 %v1261, 0.05243302
    %v1263 = vmul.f32 %v1256, %v1262
    %v1264 = vadd.f32 %v1263, 0.18741608
    %v1265 = vmul.f32 %v1256, %v1264
    %v1266 = vadd.f32 %v1265, 1.1283791
    %v1267 = vmul.f32 %v1251, %v1266
    %v1268 = vmul.f32 %v1256, 3.8918573e-05
    %v1269 = vadd.f32 %v1268, 0.001143296
    %v1270 = vmul.f32 %v1256, %v1269
    %v1271 = vadd.f32 %v1270, 0.014752088
    %v1272 = vmul.f32 %v1256, %v1271
    %v1273 = vadd.f32 %v1272, 0.112945676
    %v1274 = vmul.f32 %v1256, %v1273
    %v1275 = vadd.f32 %v1274, 0.4994258
    %v1276 = vmul.f32 %v1256, %v1275
    %v1277 = vadd.f32 %v1276, 1.0
    %v1278 = vrcp.pop %v1277
    %v1279 = vmul.f32 %v1277, %v1278
    %v1280 = vsub.f32 1.0, %v1279
    %v1281 = vmul.f32 %v1278, %v1280
    %v1282 = vadd.f32 %v1278, %v1281
    %vm1283 = vweird.f32 %v1277
    %vm1284 = vweird.f32 %v1278
    %vm1285 = vmor %vm1283, %vm1284
    %v1286 = vsel %vm1285, %v1278, %v1282
    %v1287 = vand.u32 2147483647, %v1277
    %vm1288 = vcmp.eq.f32.partialorder %v1287, 8.507059e+37
    %v1289 = vand.u32 %v1277, 2147483648
    %v1290 = vor.u32 1.1754944e-38, %v1289
    %v1291 = vsel %vm1288, %v1290, %v1286
    %v1292 = vmul.f32 %v1267, %v1291
    %v1293 = vmin.f32 %v1292, 1.0
    %v1294 = vmax.f32 %v1293, -1.0
    %v1295 = vmul.f32 %v1252, %v1252
    %v1296 = vmin.f32 16.0, %v1295
    %v1297 = vmul.f32 %v1296, 2.1237322e-06
    %v1298 = vadd.f32 %v1297, 0.00028619796
    %v1299 = vmul.f32 %v1296, %v1298
    %v1300 = vadd.f32 %v1299, 0.0036580483
    %v1301 = vmul.f32 %v1296, %v1300
    %v1302 = vadd.f32 %v1301, 0.05243302
    %v1303 = vmul.f32 %v1296, %v1302
    %v1304 = vadd.f32 %v1303, 0.18741608
    %v1305 = vmul.f32 %v1296, %v1304
    %v1306 = vadd.f32 %v1305, 1.1283791
    %v1307 = vmul.f32 %v1252, %v1306
    %v1308 = vmul.f32 %v1296, 3.8918573e-05
    %v1309 = vadd.f32 %v1308, 0.001143296
    %v1310 = vmul.f32 %v1296, %v1309
    %v1311 = vadd.f32 %v1310, 0.014752088
    %v1312 = vmul.f32 %v1296, %v1311
    %v1313 = vadd.f32 %v1312, 0.112945676
    %v1314 = vmul.f32 %v1296, %v1313
    %v1315 = vadd.f32 %v1314, 0.4994258
    %v1316 = vmul.f32 %v1296, %v1315
    %v1317 = vadd.f32 %v1316, 1.0
    %v1318 = vrcp.pop %v1317
    %v1319 = vmul.f32 %v1317, %v1318
    %v1320 = vsub.f32 1.0, %v1319
    %v1321 = vmul.f32 %v1318, %v1320
    %v1322 = vadd.f32 %v1318, %v1321
    %vm1323 = vweird.f32 %v1317
    %vm1324 = vweird.f32 %v1318
    %vm1325 = vmor %vm1323, %vm1324
    %v1326 = vsel %vm1325, %v1318, %v1322
    %v1327 = vand.u32 2147483647, %v1317
    %vm1328 = vcmp.eq.f32.partialorder %v1327, 8.507059e+37
    %v1329 = vand.u32 %v1317, 2147483648
    %v1330 = vor.u32 1.1754944e-38, %v1329
    %v1331 = vsel %vm1328, %v1330, %v1326
    %v1332 = vmul.f32 %v1307, %v1331
    %v1333 = vmin.f32 %v1332, 1.0
    %v1334 = vmax.f32 %v1333, -1.0
    %v1335 = vmul.f32 %v1253, %v1253
    %v1336 = vmin.f32 16.0, %v1335
    %v1337 = vmul.f32 %v1336, 2.1237322e-06
    %v1338 = vadd.f32 %v1337, 0.00028619796
    %v1339 = vmul.f32 %v1336, %v1338
    %v1340 = vadd.f32 %v1339, 0.0036580483
    %v1341 = vmul.f32 %v1336, %v1340
    %v1342 = vadd.f32 %v1341, 0.05243302
    %v1343 = vmul.f32 %v1336, %v1342
    %v1344 = vadd.f32 %v1343, 0.18741608
    %v1345 = vmul.f32 %v1336, %v1344
    %v1346 = vadd.f32 %v1345, 1.1283791
    %v1347 = vmul.f32 %v1253, %v1346
    %v1348 = vmul.f32 %v1336, 3.8918573e-05
    %v1349 = vadd.f32 %v1348, 0.001143296
    %v1350 = vmul.f32 %v1336, %v1349
    %v1351 = vadd.f32 %v1350, 0.014752088
    %v1352 = vmul.f32 %v1336, %v1351
    %v1353 = vadd.f32 %v1352, 0.112945676
    %v1354 = vmul.f32 %v1336, %v1353
    %v1355 = vadd.f32 %v1354, 0.4994258
    %v1356 = vmul.f32 %v1336, %v1355
    %v1357 = vadd.f32 %v1356, 1.0
    %v1358 = vrcp.pop %v1357
    %v1359 = vmul.f32 %v1357, %v1358
    %v1360 = vsub.f32 1.0, %v1359
    %v1361 = vmul.f32 %v1358, %v1360
    %v1362 = vadd.f32 %v1358, %v1361
    %vm1363 = vweird.f32 %v1357
    %vm1364 = vweird.f32 %v1358
    %vm1365 = vmor %vm1363, %vm1364
    %v1366 = vsel %vm1365, %v1358, %v1362
    %v1367 = vand.u32 2147483647, %v1357
    %vm1368 = vcmp.eq.f32.partialorder %v1367, 8.507059e+37
    %v1369 = vand.u32 %v1357, 2147483648
    %v1370 = vor.u32 1.1754944e-38, %v1369
    %v1371 = vsel %vm1368, %v1370, %v1366
    %v1372 = vmul.f32 %v1347, %v1371
    %v1373 = vmin.f32 %v1372, 1.0
    %v1374 = vmax.f32 %v1373, -1.0
    %v1375 = vmul.f32 %v1254, %v1254
    %v1376 = vmin.f32 16.0, %v1375
    %v1377 = vmul.f32 %v1376, 2.1237322e-06
    %v1378 = vadd.f32 %v1377, 0.00028619796
    %v1379 = vmul.f32 %v1376, %v1378
    %v1380 = vadd.f32 %v1379, 0.0036580483
    %v1381 = vmul.f32 %v1376, %v1380
    %v1382 = vadd.f32 %v1381, 0.05243302
    %v1383 = vmul.f32 %v1376, %v1382
    %v1384 = vadd.f32 %v1383, 0.18741608
    %v1385 = vmul.f32 %v1376, %v1384
    %v1386 = vadd.f32 %v1385, 1.1283791
    %v1387 = vmul.f32 %v1254, %v1386
    %v1388 = vmul.f32 %v1376, 3.8918573e-05
    %v1389 = vadd.f32 %v1388, 0.001143296
    %v1390 = vmul.f32 %v1376, %v1389
    %v1391 = vadd.f32 %v1390, 0.014752088
    %v1392 = vmul.f32 %v1376, %v1391
    %v1393 = vadd.f32 %v1392, 0.112945676
    %v1394 = vmul.f32 %v1376, %v1393
    %v1395 = vadd.f32 %v1394, 0.4994258
    %v1396 = vmul.f32 %v1376, %v1395
    %v1397 = vadd.f32 %v1396, 1.0
    %v1398 = vrcp.pop %v1397
    %v1399 = vmul.f32 %v1397, %v1398
    %v1400 = vsub.f32 1.0, %v1399
    %v1401 = vmul.f32 %v1398, %v1400
    %v1402 = vadd.f32 %v1398, %v1401
    %vm1403 = vweird.f32 %v1397
    %vm1404 = vweird.f32 %v1398
    %vm1405 = vmor %vm1403, %vm1404
    %v1406 = vsel %vm1405, %v1398, %v1402
    %v1407 = vand.u32 2147483647, %v1397
    %vm1408 = vcmp.eq.f32.partialorder %v1407, 8.507059e+37
    %v1409 = vand.u32 %v1397, 2147483648
    %v1410 = vor.u32 1.1754944e-38, %v1409
    %v1411 = vsel %vm1408, %v1410, %v1406
    %v1412 = vmul.f32 %v1387, %v1411
    %v1413 = vmin.f32 %v1412, 1.0
    %v1414 = vmax.f32 %v1413, -1.0
    %v1415 = vadd.f32 %v1294, 1.0
    %v1416 = vadd.f32 %v1334, 1.0
    %v1417 = vadd.f32 %v1374, 1.0
    %v1418 = vadd.f32 %v1414, 1.0
    %v1419 = vmul.f32 %v1247, %v1415
    %v1420 = vmul.f32 %v1248, %v1416
    %v1421 = vmul.f32 %v1249, %v1417
    %v1422 = vmul.f32 %v1250, %v1418
    %v1423 = vld [vmem:[#allocation19] sm:$0xff]
    %v1424 = vld [vmem:[#allocation19 + $0x8] sm:$0xff]
    %v1425 = vld [vmem:[#allocation19 + $0x10] sm:$0xff]
    %v1426 = vld [vmem:[#allocation19 + $0x18] sm:$0xff]
    %v1427 = vld [vmem:[#allocation19 + $0x20] sm:$0xff]
    %v1428 = vld [vmem:[#allocation19 + $0x28] sm:$0xff]
    %v1429 = vld [vmem:[#allocation19 + $0x30] sm:$0xff]
    %v1430 = vld [vmem:[#allocation19 + $0x38] sm:$0xff]
    %v1431 = vld [vmem:[#allocation19 + $0x40] sm:$0xff]
    %v1432 = vld [vmem:[#allocation19 + $0x48] sm:$0xff]
    %v1433 = vld [vmem:[#allocation19 + $0x50] sm:$0xff]
    %v1434 = vld [vmem:[#allocation19 + $0x58] sm:$0xff]
    %v1435 = vld [vmem:[#allocation19 + $0x60] sm:$0xff]
    %v1436 = vld [vmem:[#allocation19 + $0x68] sm:$0xff]
    %v1437 = vld [vmem:[#allocation19 + $0x70] sm:$0xff]
    %v1438 = vld [vmem:[#allocation19 + $0x78] sm:$0xff]
    %v1439 = vld [vmem:[#allocation19 + $0x80] sm:$0xff]
    %v1440 = vld [vmem:[#allocation19 + $0x88] sm:$0xff]
    %v1441 = vld [vmem:[#allocation19 + $0x90] sm:$0xff]
    %v1442 = vld [vmem:[#allocation19 + $0x98] sm:$0xff]
    %v1443 = vld [vmem:[#allocation19 + $0xa0] sm:$0xff]
    %v1444 = vld [vmem:[#allocation19 + $0xa8] sm:$0xff]
    %v1445 = vld [vmem:[#allocation19 + $0xb0] sm:$0xff]
    %v1446 = vld [vmem:[#allocation19 + $0xb8] sm:$0xff]
    %v1447 = vld [vmem:[#allocation19 + $0xc0] sm:$0xff]
    %v1448 = vld [vmem:[#allocation19 + $0xc8] sm:$0xff]
    %v1449 = vld [vmem:[#allocation19 + $0xd0] sm:$0xff]
    %v1450 = vld [vmem:[#allocation19 + $0xd8] sm:$0xff]
    %v1451 = vld [vmem:[#allocation19 + $0xe0] sm:$0xff]
    %v1452 = vld [vmem:[#allocation19 + $0xe8] sm:$0xff]
    %v1453 = vld [vmem:[#allocation19 + $0xf0] sm:$0xff]
    %v1454 = vld [vmem:[#allocation19 + $0xf8] sm:$0xff]
    %v1455 = vld [vmem:[#allocation19 + $0x100] sm:$0xff]
    %v1456 = vld [vmem:[#allocation19 + $0x108] sm:$0xff]
    %v1457 = vld [vmem:[#allocation19 + $0x110] sm:$0xff]
    %v1458 = vld [vmem:[#allocation19 + $0x118] sm:$0xff]
    %v1459 = vld [vmem:[#allocation19 + $0x120] sm:$0xff]
    %v1460 = vld [vmem:[#allocation19 + $0x128] sm:$0xff]
    %v1461 = vld [vmem:[#allocation19 + $0x130] sm:$0xff]
    %v1462 = vld [vmem:[#allocation19 + $0x138] sm:$0xff]
    %v1463 = vld [vmem:[#allocation19 + $0x140] sm:$0xff]
    %v1464 = vld [vmem:[#allocation19 + $0x148] sm:$0xff]
    %v1465 = vld [vmem:[#allocation19 + $0x150] sm:$0xff]
    %v1466 = vld [vmem:[#allocation19 + $0x158] sm:$0xff]
    %v1467 = vld [vmem:[#allocation19 + $0x160] sm:$0xff]
    %v1468 = vld [vmem:[#allocation19 + $0x168] sm:$0xff]
    %v1469 = vld [vmem:[#allocation19 + $0x170] sm:$0xff]
    %v1470 = vld [vmem:[#allocation19 + $0x178] sm:$0xff]
    %v1471 = vld [vmem:[#allocation19 + $0x180] sm:$0xff]
    %v1472 = vld [vmem:[#allocation19 + $0x188] sm:$0xff]
    %v1473 = vld [vmem:[#allocation19 + $0x190] sm:$0xff]
    %v1474 = vld [vmem:[#allocation19 + $0x198] sm:$0xff]
    %v1475 = vld [vmem:[#allocation19 + $0x1a0] sm:$0xff]
    %v1476 = vld [vmem:[#allocation19 + $0x1a8] sm:$0xff]
    %v1477 = vld [vmem:[#allocation19 + $0x1b0] sm:$0xff]
    %v1478 = vld [vmem:[#allocation19 + $0x1b8] sm:$0xff]
    %v1479 = vld [vmem:[#allocation19 + $0x1c0] sm:$0xff]
    %v1480 = vld [vmem:[#allocation19 + $0x1c8] sm:$0xff]
    %v1481 = vld [vmem:[#allocation19 + $0x1d0] sm:$0xff]
    %v1482 = vld [vmem:[#allocation19 + $0x1d8] sm:$0xff]
    %v1483 = vld [vmem:[#allocation19 + $0x1e0] sm:$0xff]
    %v1484 = vld [vmem:[#allocation19 + $0x1e8] sm:$0xff]
    %v1485 = vld [vmem:[#allocation19 + $0x1f0] sm:$0xff]
    %v1486 = vld [vmem:[#allocation19 + $0x1f8] sm:$0xff]
    %v1487 = vld [vmem:[#allocation19 + $0x200] sm:$0xff]
    %v1488 = vld [vmem:[#allocation19 + $0x208] sm:$0xff]
    %v1489 = vld [vmem:[#allocation19 + $0x210] sm:$0xff]
    %v1490 = vld [vmem:[#allocation19 + $0x218] sm:$0xff]
    %v1491 = vld [vmem:[#allocation19 + $0x220] sm:$0xff]
    %v1492 = vld [vmem:[#allocation19 + $0x228] sm:$0xff]
    %v1493 = vld [vmem:[#allocation19 + $0x230] sm:$0xff]
    %v1494 = vld [vmem:[#allocation19 + $0x238] sm:$0xff]
    %v1495 = vld [vmem:[#allocation19 + $0x240] sm:$0xff]
    %v1496 = vld [vmem:[#allocation19 + $0x248] sm:$0xff]
    %v1497 = vld [vmem:[#allocation19 + $0x250] sm:$0xff]
    %v1498 = vld [vmem:[#allocation19 + $0x258] sm:$0xff]
    %v1499 = vld [vmem:[#allocation19 + $0x260] sm:$0xff]
    %v1500 = vld [vmem:[#allocation19 + $0x268] sm:$0xff]
    %v1501 = vld [vmem:[#allocation19 + $0x270] sm:$0xff]
    %v1502 = vld [vmem:[#allocation19 + $0x278] sm:$0xff]
    %v1503 = vld [vmem:[#allocation19 + $0x280] sm:$0xff]
    %v1504 = vld [vmem:[#allocation19 + $0x288] sm:$0xff]
    %v1505 = vld [vmem:[#allocation19 + $0x290] sm:$0xff]
    %v1506 = vld [vmem:[#allocation19 + $0x298] sm:$0xff]
    %v1507 = vld [vmem:[#allocation19 + $0x2a0] sm:$0xff]
    %v1508 = vld [vmem:[#allocation19 + $0x2a8] sm:$0xff]
    %v1509 = vld [vmem:[#allocation19 + $0x2b0] sm:$0xff]
    %v1510 = vld [vmem:[#allocation19 + $0x2b8] sm:$0xff]
    %v1511 = vld [vmem:[#allocation19 + $0x2c0] sm:$0xff]
    %v1512 = vld [vmem:[#allocation19 + $0x2c8] sm:$0xff]
    %v1513 = vld [vmem:[#allocation19 + $0x2d0] sm:$0xff]
    %v1514 = vld [vmem:[#allocation19 + $0x2d8] sm:$0xff]
    %v1515 = vld [vmem:[#allocation19 + $0x2e0] sm:$0xff]
    %v1516 = vld [vmem:[#allocation19 + $0x2e8] sm:$0xff]
    %v1517 = vld [vmem:[#allocation19 + $0x2f0] sm:$0xff]
    %v1518 = vld [vmem:[#allocation19 + $0x2f8] sm:$0xff]
    %v1519 = vld [vmem:[#allocation19 + $0x300] sm:$0xff]
    %v1520 = vld [vmem:[#allocation19 + $0x308] sm:$0xff]
    %v1521 = vld [vmem:[#allocation19 + $0x310] sm:$0xff]
    %v1522 = vld [vmem:[#allocation19 + $0x318] sm:$0xff]
    %v1523 = vld [vmem:[#allocation19 + $0x320] sm:$0xff]
    %v1524 = vld [vmem:[#allocation19 + $0x328] sm:$0xff]
    %v1525 = vld [vmem:[#allocation19 + $0x330] sm:$0xff]
    %v1526 = vld [vmem:[#allocation19 + $0x338] sm:$0xff]
    %v1527 = vld [vmem:[#allocation19 + $0x340] sm:$0xff]
    %v1528 = vld [vmem:[#allocation19 + $0x348] sm:$0xff]
    %v1529 = vld [vmem:[#allocation19 + $0x350] sm:$0xff]
    %v1530 = vld [vmem:[#allocation19 + $0x358] sm:$0xff]
    %v1531 = vld [vmem:[#allocation19 + $0x360] sm:$0xff]
    %v1532 = vld [vmem:[#allocation19 + $0x368] sm:$0xff]
    %v1533 = vld [vmem:[#allocation19 + $0x370] sm:$0xff]
    %v1534 = vld [vmem:[#allocation19 + $0x378] sm:$0xff]
    %v1535 = vld [vmem:[#allocation19 + $0x380] sm:$0xff]
    %v1536 = vld [vmem:[#allocation19 + $0x388] sm:$0xff]
    %v1537 = vld [vmem:[#allocation19 + $0x390] sm:$0xff]
    %v1538 = vld [vmem:[#allocation19 + $0x398] sm:$0xff]
    %v1539 = vld [vmem:[#allocation19 + $0x3a0] sm:$0xff]
    %v1540 = vld [vmem:[#allocation19 + $0x3a8] sm:$0xff]
    %v1541 = vld [vmem:[#allocation19 + $0x3b0] sm:$0xff]
    %v1542 = vld [vmem:[#allocation19 + $0x3b8] sm:$0xff]
    %v1543 = vld [vmem:[#allocation19 + $0x3c0] sm:$0xff]
    %v1544 = vld [vmem:[#allocation19 + $0x3c8] sm:$0xff]
    %v1545 = vld [vmem:[#allocation19 + $0x3d0] sm:$0xff]
    %v1546 = vld [vmem:[#allocation19 + $0x3d8] sm:$0xff]
    %v1547 = vld [vmem:[#allocation19 + $0x3e0] sm:$0xff]
    %v1548 = vld [vmem:[#allocation19 + $0x3e8] sm:$0xff]
    %v1549 = vld [vmem:[#allocation19 + $0x3f0] sm:$0xff]
    %v1550 = vld [vmem:[#allocation19 + $0x3f8] sm:$0xff]
    %v1551 = vld [vmem:[#allocation20] sm:$0xff]
    %v1552 = vld [vmem:[#allocation20 + $0x8] sm:$0xff]
    %1553 = vmatpush.msra.mxu0 %v1453
    %1554 = vmatpush.msra.mxu0 %v1451
    %1555 = vmatpush.msra.mxu0 %v1449
    %1556 = vmatpush.msra.mxu0 %v1447
    %1557 = vmatpush.msra.mxu0 %v1445
    %1558 = vmatpush.msra.mxu0 %v1443
    %1559 = vmatpush.msra.mxu0 %v1441
    %1560 = vmatpush.msra.mxu0 %v1439
    %1561 = vmatpush.msra.mxu0 %v1437
    %1562 = vmatpush.msra.mxu0 %v1435
    %1563 = vmatpush.msra.mxu0 %v1433
    %1564 = vmatpush.msra.mxu0 %v1431
    %1565 = vmatpush.msra.mxu0 %v1429
    %1566 = vmatpush.msra.mxu0 %v1427
    %1567 = vmatpush.msra.mxu0 %v1425
    %1568 = vmatpush.msra.mxu0 %v1423
    %1569 = vmatmul.f32.gmra.mxu0 %v1419
    %v1570 = vpop.f32.mrf.mxu0
    %v1571 = vadd.f32 %v1551, %v1570
    %1572 = vdwg.mxu0
    %1573 = vmatpush.msra.mxu0 %v1485
    %1574 = vmatpush.msra.mxu0 %v1483
    %1575 = vmatpush.msra.mxu0 %v1481
    %1576 = vmatpush.msra.mxu0 %v1479
    %1577 = vmatpush.msra.mxu0 %v1477
    %1578 = vmatpush.msra.mxu0 %v1475
    %1579 = vmatpush.msra.mxu0 %v1473
    %1580 = vmatpush.msra.mxu0 %v1471
    %1581 = vmatpush.msra.mxu0 %v1469
    %1582 = vmatpush.msra.mxu0 %v1467
    %1583 = vmatpush.msra.mxu0 %v1465
    %1584 = vmatpush.msra.mxu0 %v1463
    %1585 = vmatpush.msra.mxu0 %v1461
    %1586 = vmatpush.msra.mxu0 %v1459
    %1587 = vmatpush.msra.mxu0 %v1457
    %1588 = vmatpush.msra.mxu0 %v1455
    %1589 = vmatmul.f32.gmra.mxu0 %v1420
    %v1590 = vpop.f32.mrf.mxu0
    %v1591 = vadd.f32 %v1571, %v1590
    %1592 = vdwg.mxu0
    %1593 = vmatpush.msra.mxu0 %v1517
    %1594 = vmatpush.msra.mxu0 %v1515
    %1595 = vmatpush.msra.mxu0 %v1513
    %1596 = vmatpush.msra.mxu0 %v1511
    %1597 = vmatpush.msra.mxu0 %v1509
    %1598 = vmatpush.msra.mxu0 %v1507
    %1599 = vmatpush.msra.mxu0 %v1505
    %1600 = vmatpush.msra.mxu0 %v1503
    %1601 = vmatpush.msra.mxu0 %v1501
    %1602 = vmatpush.msra.mxu0 %v1499
    %1603 = vmatpush.msra.mxu0 %v1497
    %1604 = vmatpush.msra.mxu0 %v1495
    %1605 = vmatpush.msra.mxu0 %v1493
    %1606 = vmatpush.msra.mxu0 %v1491
    %1607 = vmatpush.msra.mxu0 %v1489
    %1608 = vmatpush.msra.mxu0 %v1487
    %1609 = vmatmul.f32.gmra.mxu0 %v1421
    %v1610 = vpop.f32.mrf.mxu0
    %v1611 = vadd.f32 %v1591, %v1610
    %1612 = vdwg.mxu0
    %1613 = vmatpush.msra.mxu0 %v1549
    %1614 = vmatpush.msra.mxu0 %v1547
    %1615 = vmatpush.msra.mxu0 %v1545
    %1616 = vmatpush.msra.mxu0 %v1543
    %1617 = vmatpush.msra.mxu0 %v1541
    %1618 = vmatpush.msra.mxu0 %v1539
    %1619 = vmatpush.msra.mxu0 %v1537
    %1620 = vmatpush.msra.mxu0 %v1535
    %1621 = vmatpush.msra.mxu0 %v1533
    %1622 = vmatpush.msra.mxu0 %v1531
    %1623 = vmatpush.msra.mxu0 %v1529
    %1624 = vmatpush.msra.mxu0 %v1527
    %1625 = vmatpush.msra.mxu0 %v1525
    %1626 = vmatpush.msra.mxu0 %v1523
    %1627 = vmatpush.msra.mxu0 %v1521
    %1628 = vmatpush.msra.mxu0 %v1519
    %1629 = vmatmul.f32.gmra.mxu0 %v1422
    %v1630 = vpop.f32.mrf.mxu0
    %v1631 = vadd.f32 %v1611, %v1630
    %1632 = vdwg.mxu0
    %1633 = vmatpush.msra.mxu0 %v1454
    %1634 = vmatpush.msra.mxu0 %v1452
    %1635 = vmatpush.msra.mxu0 %v1450
    %1636 = vmatpush.msra.mxu0 %v1448
    %1637 = vmatpush.msra.mxu0 %v1446
    %1638 = vmatpush.msra.mxu0 %v1444
    %1639 = vmatpush.msra.mxu0 %v1442
    %1640 = vmatpush.msra.mxu0 %v1440
    %1641 = vmatpush.msra.mxu0 %v1438
    %1642 = vmatpush.msra.mxu0 %v1436
    %1643 = vmatpush.msra.mxu0 %v1434
    %1644 = vmatpush.msra.mxu0 %v1432
    %1645 = vmatpush.msra.mxu0 %v1430
    %1646 = vmatpush.msra.mxu0 %v1428
    %1647 = vmatpush.msra.mxu0 %v1426
    %1648 = vmatpush.msra.mxu0 %v1424
    %1649 = vmatmul.f32.gmra.mxu0 %v1419
    %v1650 = vpop.f32.mrf.mxu0
    %v1651 = vadd.f32 %v1552, %v1650
    %1652 = vdwg.mxu0
    %1653 = vmatpush.msra.mxu0 %v1486
    %1654 = vmatpush.msra.mxu0 %v1484
    %1655 = vmatpush.msra.mxu0 %v1482
    %1656 = vmatpush.msra.mxu0 %v1480
    %1657 = vmatpush.msra.mxu0 %v1478
    %1658 = vmatpush.msra.mxu0 %v1476
    %1659 = vmatpush.msra.mxu0 %v1474
    %1660 = vmatpush.msra.mxu0 %v1472
    %1661 = vmatpush.msra.mxu0 %v1470
    %1662 = vmatpush.msra.mxu0 %v1468
    %1663 = vmatpush.msra.mxu0 %v1466
    %1664 = vmatpush.msra.mxu0 %v1464
    %1665 = vmatpush.msra.mxu0 %v1462
    %1666 = vmatpush.msra.mxu0 %v1460
    %1667 = vmatpush.msra.mxu0 %v1458
    %1668 = vmatpush.msra.mxu0 %v1456
    %1669 = vmatmul.f32.gmra.mxu0 %v1420
    %v1670 = vpop.f32.mrf.mxu0
    %v1671 = vadd.f32 %v1651, %v1670
    %1672 = vdwg.mxu0
    %1673 = vmatpush.msra.mxu0 %v1518
    %1674 = vmatpush.msra.mxu0 %v1516
    %1675 = vmatpush.msra.mxu0 %v1514
    %1676 = vmatpush.msra.mxu0 %v1512
    %1677 = vmatpush.msra.mxu0 %v1510
    %1678 = vmatpush.msra.mxu0 %v1508
    %1679 = vmatpush.msra.mxu0 %v1506
    %1680 = vmatpush.msra.mxu0 %v1504
    %1681 = vmatpush.msra.mxu0 %v1502
    %1682 = vmatpush.msra.mxu0 %v1500
    %1683 = vmatpush.msra.mxu0 %v1498
    %1684 = vmatpush.msra.mxu0 %v1496
    %1685 = vmatpush.msra.mxu0 %v1494
    %1686 = vmatpush.msra.mxu0 %v1492
    %1687 = vmatpush.msra.mxu0 %v1490
    %1688 = vmatpush.msra.mxu0 %v1488
    %1689 = vmatmul.f32.gmra.mxu0 %v1421
    %v1690 = vpop.f32.mrf.mxu0
    %v1691 = vadd.f32 %v1671, %v1690
    %1692 = vdwg.mxu0
    %1693 = vmatpush.msra.mxu0 %v1550
    %1694 = vmatpush.msra.mxu0 %v1548
    %1695 = vmatpush.msra.mxu0 %v1546
    %1696 = vmatpush.msra.mxu0 %v1544
    %1697 = vmatpush.msra.mxu0 %v1542
    %1698 = vmatpush.msra.mxu0 %v1540
    %1699 = vmatpush.msra.mxu0 %v1538
    %1700 = vmatpush.msra.mxu0 %v1536
    %1701 = vmatpush.msra.mxu0 %v1534
    %1702 = vmatpush.msra.mxu0 %v1532
    %1703 = vmatpush.msra.mxu0 %v1530
    %1704 = vmatpush.msra.mxu0 %v1528
    %1705 = vmatpush.msra.mxu0 %v1526
    %1706 = vmatpush.msra.mxu0 %v1524
    %1707 = vmatpush.msra.mxu0 %v1522
    %1708 = vmatpush.msra.mxu0 %v1520
    %1709 = vmatmul.f32.gmra.mxu0 %v1422
    %v1710 = vpop.f32.mrf.mxu0
    %v1711 = vadd.f32 %v1691, %v1710
    %1712 = vdwg.mxu0
    %1713 = vst [vmem:[#allocation22] sm:$0xff] %v1631
    %1714 = vst [vmem:[#allocation22 + $0x8] sm:$0xff] %v1711
    // Predicated region
    $region106: #{tpu_custom_call.1} parent=1 // pred_check
      _
    $region107: #{tpu_custom_call.1} parent=1 // pred_check_branch
      %1716 = sbr.rel (0) target = $region109
    $region108: #{tpu_custom_call.1} parent=1 // pred_region
      %1718 = vsyncadd [#allocation4], 0
      %s1720 = sshll.u32 [#allocation22], 4
      %s1721 = int_to_ptr.vmem [resolvable:$true] %s1720
      %s1722 = sshll.u32 %s14, 4
      %s1723 = int_to_ptr.hbm [resolvable:$true] %s1722
      %1725 = dma.vmem_to_hbm [thread:$0]  %s1721, 256, %s1723, [#allocation4]
    $region109: #{tpu_custom_call.1} parent=1 // pred_fallthru
      _
    // Predicated region
    $region110: #{tpu_custom_call.1} parent=1 // pred_check
      _
    $region111: #{tpu_custom_call.1} parent=1 // pred_check_branch
      %1727 = sbr.rel (0) target = $region113
    $region112: #{tpu_custom_call.1} parent=1 // pred_region
      %1729 = dma.done [#allocation4], 256
    $region113: #{tpu_custom_call.1} parent=1 // pred_fallthru
      _
    %1730 = vsyncpa [#allocation3], 1
    %1731 = vsyncpa [#allocation6], 1
    %1732 = vsyncpa [#allocation9], 1
    %1733 = vsyncpa [#allocation12], 1
    %1734 = vsyncpa [#allocation15], 1
    %1735 = vsyncpa [#allocation18], 1
    %1736 = vsyncpa [#allocation21], 1
    %1737 = vsyncpa [#allocation4], 1

</llo_original>
